<compile_context>
chip_gen: v6e
topology: v6e:2x2x1
jax: 0.10.0
libtpu: 0.0.40
codegen_flags: <defaults>
</compile_context>

<pallas_src>
import functools
import math

import jax
import jax.numpy as jnp
from jax.experimental import pallas as pl
from jax.experimental.pallas import tpu as pltpu


# ----------------------------------------------------------------------------
# Chip-generation helpers (used only for sizing / dtype decisions).
# ----------------------------------------------------------------------------
def _chip_generation():
    try:
        kind = jax.devices()[0].device_kind.lower()
    except Exception:
        return 0
    if "v7" in kind or "7x" in kind:
        return 7
    if "v6" in kind:
        return 6
    if "v5" in kind:
        return 5
    if "v4" in kind:
        return 4
    return 0


def _vmem_budget_bytes(gen):
    try:
        cap = int(pltpu.get_tpu_info().vmem_capacity_bytes)
    except Exception:
        cap = (64 if gen == 7 else 128) * 1024 * 1024
    return (3 * cap) // 4          # ~96 MiB on 128 MiB chips, ~48 MiB on v7x


# ----------------------------------------------------------------------------
# Pallas kernel: BW windows (all heads) per grid step.
# ----------------------------------------------------------------------------
def _window_attn_kernel(x_ref, wq_ref, wk_ref, wv_ref, wproj_ref, bproj_ref,
                        bias_ref, *rest, num_heads, head_dim, has_mask,
                        mask_windows, exp_bf16):
    if has_mask:
        mask_ref, o_ref = rest
    else:
        (o_ref,) = rest

    BW, N, C = x_ref.shape
    H, hd = num_heads, head_dim

    # --- chunked qkv projection: three (BW*N, C) @ (C, C) GEMMs, f32 acc -----
    x2d = x_ref[...].reshape(BW * N, C)                                  # bf16
    q = jnp.dot(x2d, wq_ref[...], preferred_element_type=jnp.float32)   # scale in wq
    k = jnp.dot(x2d, wk_ref[...], preferred_element_type=jnp.float32)
    v = jnp.dot(x2d, wv_ref[...], preferred_element_type=jnp.float32)

    # --- head split: lane slices stacked on a leading batch axis -------------
    def to_heads(t):                         # (BW*N, C) f32 -> (H*BW, N, hd) bf16
        t = t.astype(jnp.bfloat16).reshape(BW, N, C)
        return jnp.concatenate(
            [t[:, :, h * hd:(h + 1) * hd] for h in range(H)], axis=0)

    qh, kh, vh = to_heads(q), to_heads(k), to_heads(v)

    # --- one batched score einsum for all heads/windows ----------------------
    s = jnp.einsum("bqd,bkd->bqk", qh, kh,
                   preferred_element_type=jnp.float32)                  # (H*BW, N, N)
    s = s.reshape(H, BW, N, N) + bias_ref[...][:, None]                 # rel-pos bias
    if has_mask:
        # Resident mask; select the (BW, N, N) slab for this block of windows.
        start = (pl.program_id(0) * BW) % mask_windows                  # BW | mask_windows
        s = s + mask_ref[pl.ds(start, BW)][None]

    # --- softmax, normalisation deferred past the PV matmul ------------------
    z = s - jnp.max(s, axis=-1, keepdims=True)
    if exp_bf16:                            # v6e/v7x: bf16 EUP path, f32 row sums
        p = jnp.exp(z.astype(jnp.bfloat16))
        denom = jnp.sum(p.astype(jnp.float32), axis=-1, keepdims=True)
        p_mm = p.reshape(H * BW, N, N)
    else:                                   # v5e: no bf16 EUP
        p = jnp.exp(z)
        denom = jnp.sum(p, axis=-1, keepdims=True)
        p_mm = p.reshape(H * BW, N, N).astype(jnp.bfloat16)

    pv = jnp.einsum("bqk,bkd->bqd", p_mm, vh,
                    preferred_element_type=jnp.float32)                 # (H*BW, N, hd)
    inv = pl.reciprocal(denom, approx=True)                             # (H, BW, N, 1)
    ctx = (pv.reshape(H, BW, N, hd) * inv).astype(jnp.bfloat16)

    # --- merge heads back onto the channel (lane) axis, output projection ----
    y = jnp.concatenate([ctx[h] for h in range(H)], axis=-1)            # (BW, N, C) bf16
    out = jnp.dot(y.reshape(BW * N, C), wproj_ref[...],
                  preferred_element_type=jnp.float32) + bproj_ref[...]
    # proj_drop / attn_drop are identity (p = 0.0)
    o_ref[...] = out.reshape(BW, N, C).astype(o_ref.dtype)


# ----------------------------------------------------------------------------
# Window-batch sizing: largest divisor of B_ (and of gcd(B_, nW) when masked)
# that fits the generation-aware VMEM budget, keeps enough grid steps for the
# chip's TensorCore count, and (preferentially) aligns BW*N to the MXU width.
# ----------------------------------------------------------------------------
def _pick_window_batch(B_, N, C, H, nW, *, out_bytes, cap, vmem_budget,
                       mxu_align, min_steps):
    def vmem_est(bw):
        toks = bw * N
        blk = toks * C
        sc = bw * H * N * N
        est = 2 * blk * 2                       # x block, bf16, double-buffered
        est += 2 * toks * C * out_bytes         # out block, double-buffered
        est += 3 * blk * (4 + 2 + 2)            # q/k/v f32 results + bf16 + head copies
        est += sc * (4 + 4 + 2 + 2)             # scores f32, exp, p bf16 + copy
        est += blk * (4 + 2 + 2 + 4)            # pv f32, ctx bf16, y bf16, proj f32
        est += 2 * (4 * C * C * 2 + C * 4 + H * N * N * 4)   # resident weights / bias
        if nW is not None:
            est += 2 * nW * N * N * 4           # resident mask
        return est

    limit = B_ if nW is None else math.gcd(B_, nW)
    divisors = [d for d in range(1, min(limit, cap) + 1)
                if limit % d == 0 and B_ % d == 0]
    fits = [d for d in divisors if vmem_est(d) <= vmem_budget] or [1]
    pool = ([d for d in fits if B_ // d >= min_steps]
            or [d for d in fits if B_ // d >= 2]
            or fits)
    aligned = [d for d in pool if (d * N) % mxu_align == 0]
    return max(aligned if aligned else pool)


# ----------------------------------------------------------------------------
# Wrapper: builds grid / BlockSpecs and calls pallas_call.
# ----------------------------------------------------------------------------
def window_attention(x, w_qkv, w_proj, b_proj, rel_pos_bias, mask=None, *,
                     max_window_batch=64, out_dtype=jnp.bfloat16):
    """
    x:            (B_, N, C)   B_ ordered with window index varying fastest
    w_qkv:        (C, 3C)      qkv weight, pre-transposed (no bias)
    w_proj:       (C, C)       proj weight, pre-transposed
    b_proj:       (1, C)       proj bias
    rel_pos_bias: (H, N, N)    relative position bias (already gathered)
    mask:         optional (nW, N, N) additive mask
    out_dtype:    output activation dtype (bf16 by default to halve writeback)
    """
    B_, N, C = x.shape
    H = rel_pos_bias.shape[0]
    hd = C // H
    scale = hd ** (-0.5)

    gen = _chip_generation()
    vmem_budget = _vmem_budget_bytes(gen)
    nW = None if mask is None else mask.shape[0]

    bw = _pick_window_batch(
        B_, N, C, H, nW,
        out_bytes=jnp.dtype(out_dtype).itemsize,
        cap=max_window_batch,
        vmem_budget=vmem_budget,
        mxu_align=128 if gen == 5 else 256,
        min_steps=4 if gen == 7 else 2)
    grid = (B_ // bw,)

    # Fold q-scale into the q weight once; split qkv into three (C, C) blocks.
    w = w_qkv.astype(jnp.float32)
    wq = (w[:, :C] * scale).astype(jnp.bfloat16)
    wk = w[:, C:2 * C].astype(jnp.bfloat16)
    wv = w[:, 2 * C:].astype(jnp.bfloat16)

    x_bf = x.astype(jnp.bfloat16)
    wproj_bf = w_proj.astype(jnp.bfloat16)
    bproj_f = b_proj.astype(jnp.float32)
    bias_f = rel_pos_bias.astype(jnp.float32)

    in_specs = [
        pl.BlockSpec((bw, N, C), lambda b: (b, 0, 0)),      # x: BW windows
        pl.BlockSpec((C, C), lambda b: (0, 0)),             # wq (resident)
        pl.BlockSpec((C, C), lambda b: (0, 0)),             # wk (resident)
        pl.BlockSpec((C, C), lambda b: (0, 0)),             # wv (resident)
        pl.BlockSpec((C, C), lambda b: (0, 0)),             # wproj (resident)
        pl.BlockSpec((1, C), lambda b: (0, 0)),             # proj bias (resident)
        pl.BlockSpec((H, N, N), lambda b: (0, 0, 0)),       # rel-pos bias (resident)
    ]
    args = [x_bf, wq, wk, wv, wproj_bf, bproj_f, bias_f]

    if mask is not None:
        in_specs.append(pl.BlockSpec((nW, N, N), lambda b: (0, 0, 0)))  # resident mask
        args.append(mask.astype(jnp.float32))

    kernel = functools.partial(
        _window_attn_kernel,
        num_heads=H, head_dim=hd,
        has_mask=mask is not None,
        mask_windows=nW if nW is not None else 1,
        exp_bf16=gen in (6, 7))

    return pl.pallas_call(
        kernel,
        out_shape=jax.ShapeDtypeStruct((B_, N, C), out_dtype),
        grid_spec=pltpu.PrefetchScalarGridSpec(
            num_scalar_prefetch=0,
            grid=grid,
            in_specs=in_specs,
            out_specs=pl.BlockSpec((bw, N, C), lambda b: (b, 0, 0)),
        ),
        compiler_params=pltpu.CompilerParams(
            dimension_semantics=("parallel",),
            vmem_limit_bytes=int(vmem_budget)),
    )(*args)


# ----------------------------------------------------------------------------
# Parameter / buffer construction (mirrors the PyTorch __init__).
# ----------------------------------------------------------------------------
def make_params(key, dim, window_size, num_heads):
    Wh, Ww = window_size
    k1, k2, k3, k4 = jax.random.split(key, 4)

    # relative_position_bias_table: ((2Wh-1)*(2Ww-1), H), trunc_normal(std=0.02)
    table = 0.02 * jax.random.normal(k1, ((2 * Wh - 1) * (2 * Ww - 1), num_heads),
                                     dtype=jnp.float32)

    # relative_position_index (same recipe as the torch buffer)
    coords_h = jnp.arange(Wh)
    coords_w = jnp.arange(Ww)
    coords = jnp.stack(jnp.meshgrid(coords_h, coords_w, indexing="ij"))     # (2, Wh, Ww)
    coords_flat = coords.reshape(2, -1)                                     # (2, N)
    rel = coords_flat[:, :, None] - coords_flat[:, None, :]                 # (2, N, N)
    rel = jnp.transpose(rel, (1, 2, 0))                                     # (N, N, 2)
    rel = rel.at[:, :, 0].add(Wh - 1)
    rel = rel.at[:, :, 1].add(Ww - 1)
    rel = rel.at[:, :, 0].multiply(2 * Ww - 1)
    rel_index = rel.sum(-1)                                                 # (N, N)

    # Gather + permute -> (H, N, N)  (setup glue, done in plain JAX)
    N = Wh * Ww
    rel_bias = table[rel_index.reshape(-1)].reshape(N, N, num_heads)
    rel_bias = jnp.transpose(rel_bias, (2, 0, 1))

    # Linear weights, stored as (in, out) so the kernel does x @ W.
    w_qkv = 0.02 * jax.random.normal(k2, (dim, 3 * dim), dtype=jnp.float32)
    w_proj = 0.02 * jax.random.normal(k3, (dim, dim), dtype=jnp.float32)
    b_proj = 0.02 * jax.random.normal(k4, (1, dim), dtype=jnp.float32)
    return w_qkv, w_proj, b_proj, rel_bias


# Pure-JAX reference (mirrors the PyTorch forward) for correctness checks.
def reference(x, w_qkv, w_proj, b_proj, rel_bias, num_heads, mask=None):
    B_, N, C = x.shape
    hd = C // num_heads
    scale = hd ** (-0.5)
    qkv = (x @ w_qkv).reshape(B_, N, 3, num_heads, hd).transpose(2, 0, 3, 1, 4)
    q, k, v = qkv[0] * scale, qkv[1], qkv[2]
    attn = jnp.einsum("bhqd,bhkd->bhqk", q, k) + rel_bias[None]
    if mask is not None:
        nW = mask.shape[0]
        attn = attn.reshape(B_ // nW, nW, num_heads, N, N) + mask[None, :, None]
        attn = attn.reshape(B_, num_heads, N, N)
    attn = jax.nn.softmax(attn, axis=-1)
    out = jnp.einsum("bhqk,bhkd->bhqd", attn, v).transpose(0, 2, 1, 3).reshape(B_, N, C)
    return out @ w_proj + b_proj


if __name__ == "__main__":
    # dim=32, window 4x4 -> N=16, 4 heads, B_ = batch(2) * num_windows(4) = 8.
    dim = 32
    window_size = (4, 4)
    num_heads = 4
    batch = 2
    nW = 4
    B_ = batch * nW
    N = window_size[0] * window_size[1]

    key = jax.random.PRNGKey(0)
    kx, kp, km = jax.random.split(key, 3)
    x = jax.random.normal(kx, (B_, N, dim), dtype=jnp.float32)
    w_qkv, w_proj, b_proj, rel_bias = make_params(kp, dim, window_size, num_heads)

    # --- no-mask path ---------------------------------------------------------
    out = window_attention(x, w_qkv, w_proj, b_proj, rel_bias, mask=None)
    out = jax.block_until_ready(out)
    ref = reference(x, w_qkv, w_proj, b_proj, rel_bias, num_heads)
    assert out.shape == (B_, N, dim)
    assert jnp.allclose(out.astype(jnp.float32), ref, atol=2e-2, rtol=2e-2), \
        "mismatch vs reference (no mask)"

    # --- masked path (Swin shifted-window style 0 / -100 additive mask) -------
    mask = jnp.where(jax.random.uniform(km, (nW, N, N)) > 0.5, 0.0, -100.0).astype(jnp.float32)
    out_m = window_attention(x, w_qkv, w_proj, b_proj, rel_bias, mask=mask)
    out_m = jax.block_until_ready(out_m)
    ref_m = reference(x, w_qkv, w_proj, b_proj, rel_bias, num_heads, mask=mask)
    assert jnp.allclose(out_m.astype(jnp.float32), ref_m, atol=2e-2, rtol=2e-2), \
        "mismatch vs reference (mask)"

    print("KERNEL_OK")
</pallas_src>

<mosaic_0001>
module attributes {stable_mosaic.version = 11 : i64} {
  func.func @_window_attn_kernel(%arg0: i32, %arg1: memref<4x16x32xbf16, #tpu.memory_space<vmem>>, %arg2: memref<32x32xbf16, #tpu.memory_space<vmem>>, %arg3: memref<32x32xbf16, #tpu.memory_space<vmem>>, %arg4: memref<32x32xbf16, #tpu.memory_space<vmem>>, %arg5: memref<32x32xbf16, #tpu.memory_space<vmem>>, %arg6: memref<1x32xf32, #tpu.memory_space<vmem>>, %arg7: memref<4x16x16xf32, #tpu.memory_space<vmem>>, %arg8: memref<4x16x32xbf16, #tpu.memory_space<vmem>>) attributes {dimension_semantics = [#tpu.dimension_semantics<parallel>], iteration_bounds = array<i64: 2>, scalar_prefetch = 0 : i64, scratch_operands = 0 : i64, tpu.core_type = #tpu.core_type<tc>, window_params = [{transform_indices = @transform_0, window_bounds = array<i64: 4, 16, 32>}, {pipeline_mode = #tpu.pipeline_mode<synchronous>, transform_indices = @transform_1, window_bounds = array<i64: 32, 32>}, {pipeline_mode = #tpu.pipeline_mode<synchronous>, transform_indices = @transform_2, window_bounds = array<i64: 32, 32>}, {pipeline_mode = #tpu.pipeline_mode<synchronous>, transform_indices = @transform_3, window_bounds = array<i64: 32, 32>}, {pipeline_mode = #tpu.pipeline_mode<synchronous>, transform_indices = @transform_4, window_bounds = array<i64: 32, 32>}, {pipeline_mode = #tpu.pipeline_mode<synchronous>, transform_indices = @transform_5, window_bounds = array<i64: 1, 32>}, {pipeline_mode = #tpu.pipeline_mode<synchronous>, transform_indices = @transform_6, window_bounds = array<i64: 4, 16, 16>}, {transform_indices = @transform_7, window_bounds = array<i64: 4, 16, 32>}]} {
    %c0 = arith.constant 0 : index
    %c0_0 = arith.constant 0 : index
    %c0_1 = arith.constant 0 : index
    %0 = vector.load %arg1[%c0, %c0_0, %c0_1] : memref<4x16x32xbf16, #tpu.memory_space<vmem>>, vector<4x16x32xbf16>
    %1 = vector.shape_cast %0 : vector<4x16x32xbf16> to vector<64x32xbf16>
    %c0_2 = arith.constant 0 : index
    %c0_3 = arith.constant 0 : index
    %2 = vector.load %arg2[%c0_2, %c0_3] : memref<32x32xbf16, #tpu.memory_space<vmem>>, vector<32x32xbf16>
    %cst = arith.constant dense<0.000000e+00> : vector<64x32xf32>
    %3 = tpu.matmul %1, %2, %cst {dimension_numbers = #tpu.dot_dimension_numbers<[1], [0], [0], [1], [0, 0, 1, 1], [], []>} : vector<64x32xbf16>, vector<32x32xbf16>, vector<64x32xf32> -> vector<64x32xf32>
    %c0_4 = arith.constant 0 : index
    %c0_5 = arith.constant 0 : index
    %4 = vector.load %arg3[%c0_4, %c0_5] : memref<32x32xbf16, #tpu.memory_space<vmem>>, vector<32x32xbf16>
    %cst_6 = arith.constant dense<0.000000e+00> : vector<64x32xf32>
    %5 = tpu.matmul %1, %4, %cst_6 {dimension_numbers = #tpu.dot_dimension_numbers<[1], [0], [0], [1], [0, 0, 1, 1], [], []>} : vector<64x32xbf16>, vector<32x32xbf16>, vector<64x32xf32> -> vector<64x32xf32>
    %c0_7 = arith.constant 0 : index
    %c0_8 = arith.constant 0 : index
    %6 = vector.load %arg4[%c0_7, %c0_8] : memref<32x32xbf16, #tpu.memory_space<vmem>>, vector<32x32xbf16>
    %cst_9 = arith.constant dense<0.000000e+00> : vector<64x32xf32>
    %7 = tpu.matmul %1, %6, %cst_9 {dimension_numbers = #tpu.dot_dimension_numbers<[1], [0], [0], [1], [0, 0, 1, 1], [], []>} : vector<64x32xbf16>, vector<32x32xbf16>, vector<64x32xf32> -> vector<64x32xf32>
    %8 = arith.truncf %3 : vector<64x32xf32> to vector<64x32xbf16>
    %9 = vector.shape_cast %8 : vector<64x32xbf16> to vector<4x16x32xbf16>
    %10 = vector.extract_strided_slice %9 {offsets = [0, 0, 0], sizes = [4, 16, 8], strides = [1, 1, 1]} : vector<4x16x32xbf16> to vector<4x16x8xbf16>
    %11 = vector.extract_strided_slice %9 {offsets = [0, 0, 8], sizes = [4, 16, 8], strides = [1, 1, 1]} : vector<4x16x32xbf16> to vector<4x16x8xbf16>
    %12 = vector.extract_strided_slice %9 {offsets = [0, 0, 16], sizes = [4, 16, 8], strides = [1, 1, 1]} : vector<4x16x32xbf16> to vector<4x16x8xbf16>
    %13 = vector.extract_strided_slice %9 {offsets = [0, 0, 24], sizes = [4, 16, 8], strides = [1, 1, 1]} : vector<4x16x32xbf16> to vector<4x16x8xbf16>
    %14 = tpu.concatenate %10, %11, %12, %13 in 0 : vector<4x16x8xbf16>, vector<4x16x8xbf16>, vector<4x16x8xbf16>, vector<4x16x8xbf16> -> vector<16x16x8xbf16>
    %15 = arith.truncf %5 : vector<64x32xf32> to vector<64x32xbf16>
    %16 = vector.shape_cast %15 : vector<64x32xbf16> to vector<4x16x32xbf16>
    %17 = vector.extract_strided_slice %16 {offsets = [0, 0, 0], sizes = [4, 16, 8], strides = [1, 1, 1]} : vector<4x16x32xbf16> to vector<4x16x8xbf16>
    %18 = vector.extract_strided_slice %16 {offsets = [0, 0, 8], sizes = [4, 16, 8], strides = [1, 1, 1]} : vector<4x16x32xbf16> to vector<4x16x8xbf16>
    %19 = vector.extract_strided_slice %16 {offsets = [0, 0, 16], sizes = [4, 16, 8], strides = [1, 1, 1]} : vector<4x16x32xbf16> to vector<4x16x8xbf16>
    %20 = vector.extract_strided_slice %16 {offsets = [0, 0, 24], sizes = [4, 16, 8], strides = [1, 1, 1]} : vector<4x16x32xbf16> to vector<4x16x8xbf16>
    %21 = tpu.concatenate %17, %18, %19, %20 in 0 : vector<4x16x8xbf16>, vector<4x16x8xbf16>, vector<4x16x8xbf16>, vector<4x16x8xbf16> -> vector<16x16x8xbf16>
    %22 = arith.truncf %7 : vector<64x32xf32> to vector<64x32xbf16>
    %23 = vector.shape_cast %22 : vector<64x32xbf16> to vector<4x16x32xbf16>
    %24 = vector.extract_strided_slice %23 {offsets = [0, 0, 0], sizes = [4, 16, 8], strides = [1, 1, 1]} : vector<4x16x32xbf16> to vector<4x16x8xbf16>
    %25 = vector.extract_strided_slice %23 {offsets = [0, 0, 8], sizes = [4, 16, 8], strides = [1, 1, 1]} : vector<4x16x32xbf16> to vector<4x16x8xbf16>
    %26 = vector.extract_strided_slice %23 {offsets = [0, 0, 16], sizes = [4, 16, 8], strides = [1, 1, 1]} : vector<4x16x32xbf16> to vector<4x16x8xbf16>
    %27 = vector.extract_strided_slice %23 {offsets = [0, 0, 24], sizes = [4, 16, 8], strides = [1, 1, 1]} : vector<4x16x32xbf16> to vector<4x16x8xbf16>
    %28 = tpu.concatenate %24, %25, %26, %27 in 0 : vector<4x16x8xbf16>, vector<4x16x8xbf16>, vector<4x16x8xbf16>, vector<4x16x8xbf16> -> vector<16x16x8xbf16>
    "tpu.trace_start"() <{level = 10 : i32, message = "bqd,bkd->bqk"}> : () -> ()
    %cst_10 = arith.constant dense<0.000000e+00> : vector<16x16x16xf32>
    %29 = tpu.matmul %14, %21, %cst_10 {dimension_numbers = #tpu.dot_dimension_numbers<[2], [2], [1], [1], [0, 0, 0, 1, 1, 1], [0], [0]>} : vector<16x16x8xbf16>, vector<16x16x8xbf16>, vector<16x16x16xf32> -> vector<16x16x16xf32>
    "tpu.trace_stop"() : () -> ()
    %30 = vector.shape_cast %29 : vector<16x16x16xf32> to vector<4x4x16x16xf32>
    %c0_11 = arith.constant 0 : index
    %c0_12 = arith.constant 0 : index
    %c0_13 = arith.constant 0 : index
    %31 = vector.load %arg7[%c0_11, %c0_12, %c0_13] : memref<4x16x16xf32, #tpu.memory_space<vmem>>, vector<4x16x16xf32>
    %32 = vector.shape_cast %31 : vector<4x16x16xf32> to vector<4x1x16x16xf32>
    %33 = vector.broadcast %32 : vector<4x1x16x16xf32> to vector<4x4x16x16xf32>
    %34 = arith.addf %30, %33 : vector<4x4x16x16xf32>
    %cst_14 = arith.constant dense<0xFF800000> : vector<4x4x16xf32>
    %35 = vector.multi_reduction <maximumf>, %34, %cst_14 [3] : vector<4x4x16x16xf32> to vector<4x4x16xf32>
    %36 = vector.shape_cast %35 : vector<4x4x16xf32> to vector<4x4x16x1xf32>
    %37 = vector.broadcast %36 : vector<4x4x16x1xf32> to vector<4x4x16x16xf32>
    %38 = arith.subf %34, %37 : vector<4x4x16x16xf32>
    %39 = math.exp %38 : vector<4x4x16x16xf32>
    %cst_15 = arith.constant dense<0.000000e+00> : vector<4x4x16xf32>
    %40 = vector.multi_reduction <add>, %39, %cst_15 [3] : vector<4x4x16x16xf32> to vector<4x4x16xf32>
    %41 = vector.shape_cast %40 : vector<4x4x16xf32> to vector<4x4x16x1xf32>
    %42 = vector.shape_cast %39 : vector<4x4x16x16xf32> to vector<16x16x16xf32>
    %43 = arith.truncf %42 : vector<16x16x16xf32> to vector<16x16x16xbf16>
    "tpu.trace_start"() <{level = 10 : i32, message = "bqk,bkd->bqd"}> : () -> ()
    %cst_16 = arith.constant dense<0.000000e+00> : vector<16x16x8xf32>
    %44 = tpu.matmul %43, %28, %cst_16 {dimension_numbers = #tpu.dot_dimension_numbers<[2], [1], [1], [2], [0, 0, 0, 1, 1, 2], [0], [0]>} : vector<16x16x16xbf16>, vector<16x16x8xbf16>, vector<16x16x8xf32> -> vector<16x16x8xf32>
    "tpu.trace_stop"() : () -> ()
    %45 = tpu.reciprocal %41 {approx = true} : vector<4x4x16x1xf32> -> vector<4x4x16x1xf32>
    %46 = vector.shape_cast %44 : vector<16x16x8xf32> to vector<4x4x16x8xf32>
    %47 = vector.broadcast %45 : vector<4x4x16x1xf32> to vector<4x4x16x8xf32>
    %48 = arith.mulf %46, %47 : vector<4x4x16x8xf32>
    %49 = arith.truncf %48 : vector<4x4x16x8xf32> to vector<4x4x16x8xbf16>
    %50 = vector.extract_strided_slice %49 {offsets = [0, 0, 0, 0], sizes = [1, 4, 16, 8], strides = [1, 1, 1, 1]} : vector<4x4x16x8xbf16> to vector<1x4x16x8xbf16>
    %51 = vector.shape_cast %50 : vector<1x4x16x8xbf16> to vector<4x16x8xbf16>
    %52 = vector.extract_strided_slice %49 {offsets = [1, 0, 0, 0], sizes = [1, 4, 16, 8], strides = [1, 1, 1, 1]} : vector<4x4x16x8xbf16> to vector<1x4x16x8xbf16>
    %53 = vector.shape_cast %52 : vector<1x4x16x8xbf16> to vector<4x16x8xbf16>
    %54 = vector.extract_strided_slice %49 {offsets = [2, 0, 0, 0], sizes = [1, 4, 16, 8], strides = [1, 1, 1, 1]} : vector<4x4x16x8xbf16> to vector<1x4x16x8xbf16>
    %55 = vector.shape_cast %54 : vector<1x4x16x8xbf16> to vector<4x16x8xbf16>
    %56 = vector.extract_strided_slice %49 {offsets = [3, 0, 0, 0], sizes = [1, 4, 16, 8], strides = [1, 1, 1, 1]} : vector<4x4x16x8xbf16> to vector<1x4x16x8xbf16>
    %57 = vector.shape_cast %56 : vector<1x4x16x8xbf16> to vector<4x16x8xbf16>
    %58 = tpu.concatenate %51, %53, %55, %57 in 2 : vector<4x16x8xbf16>, vector<4x16x8xbf16>, vector<4x16x8xbf16>, vector<4x16x8xbf16> -> vector<4x16x32xbf16>
    %59 = vector.shape_cast %58 : vector<4x16x32xbf16> to vector<64x32xbf16>
    %c0_17 = arith.constant 0 : index
    %c0_18 = arith.constant 0 : index
    %60 = vector.load %arg5[%c0_17, %c0_18] : memref<32x32xbf16, #tpu.memory_space<vmem>>, vector<32x32xbf16>
    %cst_19 = arith.constant dense<0.000000e+00> : vector<64x32xf32>
    %61 = tpu.matmul %59, %60, %cst_19 {dimension_numbers = #tpu.dot_dimension_numbers<[1], [0], [0], [1], [0, 0, 1, 1], [], []>} : vector<64x32xbf16>, vector<32x32xbf16>, vector<64x32xf32> -> vector<64x32xf32>
    %c0_20 = arith.constant 0 : index
    %c0_21 = arith.constant 0 : index
    %62 = vector.load %arg6[%c0_20, %c0_21] : memref<1x32xf32, #tpu.memory_space<vmem>>, vector<1x32xf32>
    %63 = vector.broadcast %62 : vector<1x32xf32> to vector<64x32xf32>
    %64 = arith.addf %61, %63 : vector<64x32xf32>
    %65 = vector.shape_cast %64 : vector<64x32xf32> to vector<4x16x32xf32>
    %66 = arith.truncf %65 : vector<4x16x32xf32> to vector<4x16x32xbf16>
    %c0_22 = arith.constant 0 : index
    %c0_23 = arith.constant 0 : index
    %c0_24 = arith.constant 0 : index
    %67 = vector.load %arg8[%c0_22, %c0_23, %c0_24] : memref<4x16x32xbf16, #tpu.memory_space<vmem>>, vector<4x16x32xbf16>
    tpu.vector_store %arg8[%c0_22, %c0_23, %c0_24], %66 {strides = array<i32>} : memref<4x16x32xbf16, #tpu.memory_space<vmem>>, vector<4x16x32xbf16>,
    return
  }
  func.func @transform_0(%arg0: i32) -> (i32, i32, i32) {
    %c0_i32 = arith.constant 0 : i32
    %c0_i32_0 = arith.constant 0 : i32
    %c0_i32_1 = arith.constant 0 : i32
    return %arg0, %c0_i32, %c0_i32_0 : i32, i32, i32
  }
  func.func @transform_1(%arg0: i32) -> (i32, i32) {
    %c0_i32 = arith.constant 0 : i32
    %c0_i32_0 = arith.constant 0 : i32
    %c0_i32_1 = arith.constant 0 : i32
    return %c0_i32, %c0_i32_0 : i32, i32
  }
  func.func @transform_2(%arg0: i32) -> (i32, i32) {
    %c0_i32 = arith.constant 0 : i32
    %c0_i32_0 = arith.constant 0 : i32
    %c0_i32_1 = arith.constant 0 : i32
    return %c0_i32, %c0_i32_0 : i32, i32
  }
  func.func @transform_3(%arg0: i32) -> (i32, i32) {
    %c0_i32 = arith.constant 0 : i32
    %c0_i32_0 = arith.constant 0 : i32
    %c0_i32_1 = arith.constant 0 : i32
    return %c0_i32, %c0_i32_0 : i32, i32
  }
  func.func @transform_4(%arg0: i32) -> (i32, i32) {
    %c0_i32 = arith.constant 0 : i32
    %c0_i32_0 = arith.constant 0 : i32
    %c0_i32_1 = arith.constant 0 : i32
    return %c0_i32, %c0_i32_0 : i32, i32
  }
  func.func @transform_5(%arg0: i32) -> (i32, i32) {
    %c0_i32 = arith.constant 0 : i32
    %c0_i32_0 = arith.constant 0 : i32
    %c0_i32_1 = arith.constant 0 : i32
    return %c0_i32, %c0_i32_0 : i32, i32
  }
  func.func @transform_6(%arg0: i32) -> (i32, i32, i32) {
    %c0_i32 = arith.constant 0 : i32
    %c0_i32_0 = arith.constant 0 : i32
    %c0_i32_1 = arith.constant 0 : i32
    %c0_i32_2 = arith.constant 0 : i32
    return %c0_i32, %c0_i32_0, %c0_i32_1 : i32, i32, i32
  }
  func.func @transform_7(%arg0: i32) -> (i32, i32, i32) {
    %c0_i32 = arith.constant 0 : i32
    %c0_i32_0 = arith.constant 0 : i32
    %c0_i32_1 = arith.constant 0 : i32
    return %arg0, %c0_i32, %c0_i32_0 : i32, i32, i32
  }
}

</mosaic_0001>

<llo_original>
// kernel: tpu_custom_call.1
$region0: #{tpu_custom_call.1}
  #allocation0 [shape = 'u32[]', space=smem, size = 0x4, offset = 0x4, fixed_abs, tag = 'smem constant byte address 0x4 - core index']
  #allocation1 [shape = 'u32[144,128]{1,0:T(1,128)}', space=vmem, size = 0x12000, scoped, tag = 'internal scratch']
  %s0 = inlined_call_operand.hbm [shape: bf16[8,16,32], index: 0, kind: input, shape index: {}]
  %s1 = inlined_call_operand.hbm [shape: bf16[32,32], index: 1, kind: input, shape index: {}]
  %s2 = inlined_call_operand.hbm [shape: bf16[32,32], index: 2, kind: input, shape index: {}]
  %s3 = inlined_call_operand.hbm [shape: bf16[32,32], index: 3, kind: input, shape index: {}]
  %s4 = inlined_call_operand.hbm [shape: bf16[32,32], index: 4, kind: input, shape index: {}]
  %s5 = inlined_call_operand.vmem [shape: f32[1,32], index: 5, kind: input, shape index: {}]
  %s6 = inlined_call_operand.hbm [shape: f32[4,16,16], index: 6, kind: input, shape index: {}]
  %s7 = inlined_call_operand.hbm [shape: bf16[8,16,32], index: 7, kind: output, shape index: {}]
  %s8 = sld [smem:[#allocation0]]
  $region85: #{tpu_custom_call.1} parent=0
    _
  %s10 = ssub.s32 1, %s8
  %s11 = scalar_select 0, %s10, %s8
  $region1: #{tpu_custom_call.1} parent=0
    #allocation2 [shape = 'u8[32768]{0}', space=vmem, size = 0x8000, scoped, tag = 'input window, operand 0']
    #allocation3 [shape = 's32[2]{0}', space=sflag, size = 0x8, scoped, tag = 'scoped memory for tpu_custom_call.1']
    #allocation4 [shape = 's32[2]{0}', space=sflag, size = 0x8, scoped, tag = 'scoped memory for tpu_custom_call.1']
    #allocation5 [shape = 'u8[8192]{0}', space=vmem, size = 0x2000, scoped, tag = 'input window, operand 1, single buffered']
    #allocation6 [shape = 's32[1]{0}', space=sflag, size = 0x4, scoped, tag = 'scoped memory for tpu_custom_call.1']
    #allocation7 [shape = 'u8[8192]{0}', space=vmem, size = 0x2000, scoped, tag = 'input window, operand 2, single buffered']
    #allocation8 [shape = 'u8[8192]{0}', space=vmem, size = 0x2000, scoped, tag = 'input window, operand 3, single buffered']
    #allocation9 [shape = 's32[1]{0}', space=sflag, size = 0x4, scoped, tag = 'scoped memory for tpu_custom_call.1']
    #allocation10 [shape = 'u8[8192]{0}', space=vmem, size = 0x2000, scoped, tag = 'input window, operand 4, single buffered']
    #allocation11 [shape = 'u8[32768]{0}', space=vmem, size = 0x8000, scoped, tag = 'input window, operand 6, single buffered']
    #allocation12 [shape = 's32[1]{0}', space=sflag, size = 0x4, scoped, tag = 'scoped memory for tpu_custom_call.1']
    #allocation13 [shape = 'u8[32768]{0}', space=vmem, size = 0x8000, scoped, tag = 'output window, operand 0']
    %12 = vsyncpa [#allocation3], 0
    %s13 = scalar_lea.sflag [#allocation3], 1
    %14 = vsyncpa %s13, 0
    %15 = vsyncpa [#allocation6], 0
    %16 = vsyncpa [#allocation9], 0
    %17 = vsyncpa [#allocation12], 0
    %18 = vsyncpa [#allocation4], 0
    %s19 = scalar_lea.sflag [#allocation4], 1
    %20 = vsyncpa %s19, 0
    loop: start=0, step=1, limit=4
    $region2: #{tpu_custom_call.1} parent=1 // loop_pre_header
      _
    $region3: #{tpu_custom_call.1} parent=1 // loop_header
      %s22 = sphi 0, %s26
      %p23 = scmp.ge.s32.totalorder %s22, 4
      %s32 = sphi 0, %s34
      %s35 = sphi 0, %s32
      %s36 = sphi 0, %s35
      %s52 = sphi 0, %s36
      %s56 = sphi 0, %s56
      %s58 = sphi 0, %s56
      %s59 = sphi 0, %s58
      %s73 = sphi 0, %s59
      %s77 = sphi 0, %s77
      %s79 = sphi 0, %s77
      %s80 = sphi 0, %s79
      %s94 = sphi 0, %s80
      %s98 = sphi 0, %s98
      %s100 = sphi 0, %s98
      %s101 = sphi 0, %s100
      %s115 = sphi 0, %s101
      %s119 = sphi 0, %s119
      %s121 = sphi 0, %s119
      %s122 = sphi 0, %s121
      %s136 = sphi 0, %s122
      %s140 = sphi 0, %s140
      %s142 = sphi 0, %s140
      %s143 = sphi 0, %s142
      %s157 = sphi 0, %s143
      %s161 = sphi 0, %s161
      %s163 = sphi 0, %s161
      %s164 = sphi 0, %s163
      %s178 = sphi 0, %s164
      %s184 = sphi 0, %s186
      %s187 = sphi 0, %s184
      %s188 = sphi 0, %s187
      %s204 = sphi 0, %s188
    $region4: #{tpu_custom_call.1} parent=1 // loop_header_branch
      %25 = sbr.rel (%p23) target = $region8
    $region5: #{tpu_custom_call.1} parent=1 // loop_body
      %s27 = ssub.s32 %s22, 1
      %s28 = ssub.s32 %s22, 2
      %s29 = sadd.s32 %s22, 1
      %s30 = ssub.s32 %s22, %s29
      %p31 = scmp.eq.s32.totalorder %s30, 0
      %s33 = sadd.s32 %s32, 1
      %s34 = scalar_select %p31, %s32, %s33
      %p37 = pneg %p31
      %p38 = scmp.eq.s32.totalorder %s22, 1
      %p39 = por %p37, %p38
      %p40 = scmp.ne.s32.totalorder %s32, %s35
      %p41 = scmp.eq.s32.totalorder %s22, 0
      %p42 = por %p40, %p41
      %p43 = scmp.ne.s32.totalorder %s32, %s35
      %p44 = scmp.eq.s32.totalorder %s27, 1
      %p45 = por %p43, %p44
      %p46 = scmp.ne.s32.totalorder %s35, %s36
      %p47 = scmp.eq.s32.totalorder %s27, 0
      %p48 = por %p46, %p47
      %p49 = scmp.ne.s32.totalorder %s35, %s36
      %p50 = scmp.eq.s32.totalorder %s28, 1
      %p51 = por %p49, %p50
      %p53 = scmp.ne.s32.totalorder %s36, %s52
      %p54 = scmp.eq.s32.totalorder %s28, 0
      %p55 = por %p53, %p54
      %s57 = sadd.s32 %s56, 1
      %p60 = scmp.eq.s32.totalorder %s22, 1
      %p61 = scmp.ne.s32.totalorder %s56, %s58
      %p62 = scmp.eq.s32.totalorder %s22, 0
      %p63 = por %p61, %p62
      %p64 = scmp.ne.s32.totalorder %s56, %s58
      %p65 = scmp.eq.s32.totalorder %s27, 1
      %p66 = por %p64, %p65
      %p67 = scmp.ne.s32.totalorder %s58, %s59
      %p68 = scmp.eq.s32.totalorder %s27, 0
      %p69 = por %p67, %p68
      %p70 = scmp.ne.s32.totalorder %s58, %s59
      %p71 = scmp.eq.s32.totalorder %s28, 1
      %p72 = por %p70, %p71
      %p74 = scmp.ne.s32.totalorder %s59, %s73
      %p75 = scmp.eq.s32.totalorder %s28, 0
      %p76 = por %p74, %p75
      %s78 = sadd.s32 %s77, 1
      %p81 = scmp.eq.s32.totalorder %s22, 1
      %p82 = scmp.ne.s32.totalorder %s77, %s79
      %p83 = scmp.eq.s32.totalorder %s22, 0
      %p84 = por %p82, %p83
      %p85 = scmp.ne.s32.totalorder %s77, %s79
      %p86 = scmp.eq.s32.totalorder %s27, 1
      %p87 = por %p85, %p86
      %p88 = scmp.ne.s32.totalorder %s79, %s80
      %p89 = scmp.eq.s32.totalorder %s27, 0
      %p90 = por %p88, %p89
      %p91 = scmp.ne.s32.totalorder %s79, %s80
      %p92 = scmp.eq.s32.totalorder %s28, 1
      %p93 = por %p91, %p92
      %p95 = scmp.ne.s32.totalorder %s80, %s94
      %p96 = scmp.eq.s32.totalorder %s28, 0
      %p97 = por %p95, %p96
      %s99 = sadd.s32 %s98, 1
      %p102 = scmp.eq.s32.totalorder %s22, 1
      %p103 = scmp.ne.s32.totalorder %s98, %s100
      %p104 = scmp.eq.s32.totalorder %s22, 0
      %p105 = por %p103, %p104
      %p106 = scmp.ne.s32.totalorder %s98, %s100
      %p107 = scmp.eq.s32.totalorder %s27, 1
      %p108 = por %p106, %p107
      %p109 = scmp.ne.s32.totalorder %s100, %s101
      %p110 = scmp.eq.s32.totalorder %s27, 0
      %p111 = por %p109, %p110
      %p112 = scmp.ne.s32.totalorder %s100, %s101
      %p113 = scmp.eq.s32.totalorder %s28, 1
      %p114 = por %p112, %p113
      %p116 = scmp.ne.s32.totalorder %s101, %s115
      %p117 = scmp.eq.s32.totalorder %s28, 0
      %p118 = por %p116, %p117
      %s120 = sadd.s32 %s119, 1
      %p123 = scmp.eq.s32.totalorder %s22, 1
      %p124 = scmp.ne.s32.totalorder %s119, %s121
      %p125 = scmp.eq.s32.totalorder %s22, 0
      %p126 = por %p124, %p125
      %p127 = scmp.ne.s32.totalorder %s119, %s121
      %p128 = scmp.eq.s32.totalorder %s27, 1
      %p129 = por %p127, %p128
      %p130 = scmp.ne.s32.totalorder %s121, %s122
      %p131 = scmp.eq.s32.totalorder %s27, 0
      %p132 = por %p130, %p131
      %p133 = scmp.ne.s32.totalorder %s121, %s122
      %p134 = scmp.eq.s32.totalorder %s28, 1
      %p135 = por %p133, %p134
      %p137 = scmp.ne.s32.totalorder %s122, %s136
      %p138 = scmp.eq.s32.totalorder %s28, 0
      %p139 = por %p137, %p138
      %s141 = sadd.s32 %s140, 1
      %p144 = scmp.eq.s32.totalorder %s22, 1
      %p145 = scmp.ne.s32.totalorder %s140, %s142
      %p146 = scmp.eq.s32.totalorder %s22, 0
      %p147 = por %p145, %p146
      %p148 = scmp.ne.s32.totalorder %s140, %s142
      %p149 = scmp.eq.s32.totalorder %s27, 1
      %p150 = por %p148, %p149
      %p151 = scmp.ne.s32.totalorder %s142, %s143
      %p152 = scmp.eq.s32.totalorder %s27, 0
      %p153 = por %p151, %p152
      %p154 = scmp.ne.s32.totalorder %s142, %s143
      %p155 = scmp.eq.s32.totalorder %s28, 1
      %p156 = por %p154, %p155
      %p158 = scmp.ne.s32.totalorder %s143, %s157
      %p159 = scmp.eq.s32.totalorder %s28, 0
      %p160 = por %p158, %p159
      %s162 = sadd.s32 %s161, 1
      %p165 = scmp.eq.s32.totalorder %s22, 1
      %p166 = scmp.ne.s32.totalorder %s161, %s163
      %p167 = scmp.eq.s32.totalorder %s22, 0
      %p168 = por %p166, %p167
      %p169 = scmp.ne.s32.totalorder %s161, %s163
      %p170 = scmp.eq.s32.totalorder %s27, 1
      %p171 = por %p169, %p170
      %p172 = scmp.ne.s32.totalorder %s163, %s164
      %p173 = scmp.eq.s32.totalorder %s27, 0
      %p174 = por %p172, %p173
      %p175 = scmp.ne.s32.totalorder %s163, %s164
      %p176 = scmp.eq.s32.totalorder %s28, 1
      %p177 = por %p175, %p176
      %p179 = scmp.ne.s32.totalorder %s164, %s178
      %p180 = scmp.eq.s32.totalorder %s28, 0
      %p181 = por %p179, %p180
      %s182 = ssub.s32 %s22, %s29
      %p183 = scmp.eq.s32.totalorder %s182, 0
      %s185 = sadd.s32 %s184, 1
      %s186 = scalar_select %p183, %s184, %s185
      %p189 = pneg %p183
      %p190 = scmp.eq.s32.totalorder %s22, 1
      %p191 = por %p189, %p190
      %p192 = scmp.ne.s32.totalorder %s184, %s187
      %p193 = scmp.eq.s32.totalorder %s22, 0
      %p194 = por %p192, %p193
      %p195 = scmp.ne.s32.totalorder %s184, %s187
      %p196 = scmp.eq.s32.totalorder %s27, 1
      %p197 = por %p195, %p196
      %p198 = scmp.ne.s32.totalorder %s187, %s188
      %p199 = scmp.eq.s32.totalorder %s27, 0
      %p200 = por %p198, %p199
      %p201 = scmp.ne.s32.totalorder %s187, %s188
      %p202 = scmp.eq.s32.totalorder %s28, 1
      %p203 = por %p201, %p202
      %p205 = scmp.ne.s32.totalorder %s188, %s204
      %p206 = scmp.eq.s32.totalorder %s28, 0
      %p207 = por %p205, %p206
      %p208 = scmp.le.s32.totalorder 1, %s22
      %p209 = scmp.lt.s32.totalorder %s22, 3
      %p210 = pnand %p208, %p209
      %p211 = pneg %p210
      // Predicated region
      $region9: #{tpu_custom_call.1} parent=5 // pred_check
        _
      $region10: #{tpu_custom_call.1} parent=5 // pred_check_branch
        %213 = sbr.rel (%p210) target = $region12
      $region11: #{tpu_custom_call.1} parent=5 // pred_region
        %s214 = ssub.s32 %s22, 1
        // Predicated region
        $region13: #{tpu_custom_call.1} parent=11 // pred_check
          %p215 = pneg %p69
        $region14: #{tpu_custom_call.1} parent=11 // pred_check_branch
          %217 = sbr.rel (%p215) target = $region16
        $region15: #{tpu_custom_call.1} parent=11 // pred_region
          %s219 = ssub.s32 256, 256
          %220 = vsyncadd [#allocation6], %s219
          %s221 = sshll.u32 [#allocation5], 4
          %s222 = int_to_ptr.vmem [resolvable:$true] %s221
          %227 = dma.hbm_to_vmem [thread:$0]  %s1, 256, %s222, [#allocation6], 64, 64, 4
        $region16: #{tpu_custom_call.1} parent=11 // pred_fallthru
          _
        // Predicated region
        $region17: #{tpu_custom_call.1} parent=11 // pred_check
          %p228 = pneg %p90
        $region18: #{tpu_custom_call.1} parent=11 // pred_check_branch
          %230 = sbr.rel (%p228) target = $region20
        $region19: #{tpu_custom_call.1} parent=11 // pred_region
          %s232 = ssub.s32 256, 256
          %233 = vsyncadd [#allocation6], %s232
          %s234 = sshll.u32 [#allocation7], 4
          %s235 = int_to_ptr.vmem [resolvable:$true] %s234
          %240 = dma.hbm_to_vmem [thread:$0]  %s2, 256, %s235, [#allocation6], 64, 64, 4
        $region20: #{tpu_custom_call.1} parent=11 // pred_fallthru
          _
        // Predicated region
        $region21: #{tpu_custom_call.1} parent=11 // pred_check
          %p241 = pneg %p111
        $region22: #{tpu_custom_call.1} parent=11 // pred_check_branch
          %243 = sbr.rel (%p241) target = $region24
        $region23: #{tpu_custom_call.1} parent=11 // pred_region
          %s245 = ssub.s32 256, 256
          %246 = vsyncadd [#allocation9], %s245
          %s247 = sshll.u32 [#allocation8], 4
          %s248 = int_to_ptr.vmem [resolvable:$true] %s247
          %253 = dma.hbm_to_vmem [thread:$0]  %s3, 256, %s248, [#allocation9], 64, 64, 4
        $region24: #{tpu_custom_call.1} parent=11 // pred_fallthru
          _
        // Predicated region
        $region25: #{tpu_custom_call.1} parent=11 // pred_check
          %p254 = pneg %p132
        $region26: #{tpu_custom_call.1} parent=11 // pred_check_branch
          %256 = sbr.rel (%p254) target = $region28
        $region27: #{tpu_custom_call.1} parent=11 // pred_region
          %s258 = ssub.s32 256, 256
          %259 = vsyncadd [#allocation9], %s258
          %s260 = sshll.u32 [#allocation10], 4
          %s261 = int_to_ptr.vmem [resolvable:$true] %s260
          %266 = dma.hbm_to_vmem [thread:$0]  %s4, 256, %s261, [#allocation9], 64, 64, 4
        $region28: #{tpu_custom_call.1} parent=11 // pred_fallthru
          _
        // Predicated region
        $region29: #{tpu_custom_call.1} parent=11 // pred_check
          %p267 = pneg %p153
        $region30: #{tpu_custom_call.1} parent=11 // pred_check_branch
          %269 = sbr.rel (%p267) target = $region32
        $region31: #{tpu_custom_call.1} parent=11 // pred_region
          _
        $region32: #{tpu_custom_call.1} parent=11 // pred_fallthru
          _
        // Predicated region
        $region33: #{tpu_custom_call.1} parent=11 // pred_check
          %p270 = pneg %p174
        $region34: #{tpu_custom_call.1} parent=11 // pred_check_branch
          %272 = sbr.rel (%p270) target = $region36
        $region35: #{tpu_custom_call.1} parent=11 // pred_region
          %s274 = ssub.s32 1024, 1024
          %275 = vsyncadd [#allocation12], %s274
          %s276 = sshll.u32 [#allocation11], 4
          %s277 = int_to_ptr.vmem [resolvable:$true] %s276
          %282 = dma.hbm_to_vmem [thread:$0]  %s6, 1024, %s277, [#allocation12], 128, 128, 8
        $region36: #{tpu_custom_call.1} parent=11 // pred_fallthru
          _
      $region12: #{tpu_custom_call.1} parent=5 // pred_fallthru
        _
      %p283 = scmp.lt.s32.totalorder %s22, 2
      // Predicated region
      $region37: #{tpu_custom_call.1} parent=5 // pred_check
        %p284 = pneg %p283
      $region38: #{tpu_custom_call.1} parent=5 // pred_check_branch
        %286 = sbr.rel (%p284) target = $region40
      $region39: #{tpu_custom_call.1} parent=5 // pred_region
        // Predicated region
        $region41: #{tpu_custom_call.1} parent=39 // pred_check
          %p287 = pneg %p42
        $region42: #{tpu_custom_call.1} parent=39 // pred_check_branch
          %289 = sbr.rel (%p287) target = $region44
        $region43: #{tpu_custom_call.1} parent=39 // pred_region
          %s290 = sand.u32 %s32, 1
          %s291 = scalar_lea.sflag [#allocation3], %s290
          %s292 = sand.u32 %s32, 1
          %s293 = smul.addr %s292, 32
          %s294 = scalar_lea.vmem [#allocation2], %s293
          %s295 = smul.u32 4, %s22
          %s297 = ssub.s32 512, 512
          %298 = vsyncadd %s291, %s297
          %s299 = smul.addr %s295, 2
          %s300 = smul.addr %s299, 64
          %s301 = scalar_lea.hbm %s0, %s300
          %s302 = sshll.u32 %s294, 4
          %s303 = int_to_ptr.vmem [resolvable:$true] %s302
          %308 = dma.hbm_to_vmem [thread:$0]  %s301, 512, %s303, %s291, 64, 64, 4
        $region44: #{tpu_custom_call.1} parent=39 // pred_fallthru
          _
      $region40: #{tpu_custom_call.1} parent=5 // pred_fallthru
        _
      %p309 = scmp.le.s32.totalorder 1, %s22
      %p310 = scmp.lt.s32.totalorder %s22, 3
      %p311 = pnand %p309, %p310
      %p312 = pneg %p311
      // Predicated region
      $region45: #{tpu_custom_call.1} parent=5 // pred_check
        _
      $region46: #{tpu_custom_call.1} parent=5 // pred_check_branch
        %314 = sbr.rel (%p311) target = $region48
      $region47: #{tpu_custom_call.1} parent=5 // pred_region
        %s315 = ssub.s32 %s22, 1
        %s316 = sand.u32 %s35, 1
        %s317 = scalar_lea.sflag [#allocation3], %s316
        %s318 = sand.u32 %s35, 1
        %s319 = smul.addr %s318, 32
        %s320 = scalar_lea.vmem [#allocation2], %s319
        // Predicated region
        $region49: #{tpu_custom_call.1} parent=47 // pred_check
          %p321 = pneg %p48
        $region50: #{tpu_custom_call.1} parent=47 // pred_check_branch
          %323 = sbr.rel (%p321) target = $region52
        $region51: #{tpu_custom_call.1} parent=47 // pred_region
          %324 = dma.done %s317, 512
        $region52: #{tpu_custom_call.1} parent=47 // pred_fallthru
          _
        // Predicated region
        $region53: #{tpu_custom_call.1} parent=47 // pred_check
          %p325 = pneg %p69
        $region54: #{tpu_custom_call.1} parent=47 // pred_check_branch
          %327 = sbr.rel (%p325) target = $region56
        $region55: #{tpu_custom_call.1} parent=47 // pred_region
          %328 = dma.done [#allocation6], 256
        $region56: #{tpu_custom_call.1} parent=47 // pred_fallthru
          _
        // Predicated region
        $region57: #{tpu_custom_call.1} parent=47 // pred_check
          %p329 = pneg %p90
        $region58: #{tpu_custom_call.1} parent=47 // pred_check_branch
          %331 = sbr.rel (%p329) target = $region60
        $region59: #{tpu_custom_call.1} parent=47 // pred_region
          %332 = dma.done [#allocation6], 256
        $region60: #{tpu_custom_call.1} parent=47 // pred_fallthru
          _
        // Predicated region
        $region61: #{tpu_custom_call.1} parent=47 // pred_check
          %p333 = pneg %p111
        $region62: #{tpu_custom_call.1} parent=47 // pred_check_branch
          %335 = sbr.rel (%p333) target = $region64
        $region63: #{tpu_custom_call.1} parent=47 // pred_region
          %336 = dma.done [#allocation9], 256
        $region64: #{tpu_custom_call.1} parent=47 // pred_fallthru
          _
        // Predicated region
        $region65: #{tpu_custom_call.1} parent=47 // pred_check
          %p337 = pneg %p132
        $region66: #{tpu_custom_call.1} parent=47 // pred_check_branch
          %339 = sbr.rel (%p337) target = $region68
        $region67: #{tpu_custom_call.1} parent=47 // pred_region
          %340 = dma.done [#allocation9], 256
        $region68: #{tpu_custom_call.1} parent=47 // pred_fallthru
          _
        // Predicated region
        $region69: #{tpu_custom_call.1} parent=47 // pred_check
          %p341 = pneg %p174
        $region70: #{tpu_custom_call.1} parent=47 // pred_check_branch
          %343 = sbr.rel (%p341) target = $region72
        $region71: #{tpu_custom_call.1} parent=47 // pred_region
          %344 = dma.done [#allocation12], 1024
        $region72: #{tpu_custom_call.1} parent=47 // pred_fallthru
          _
        %s345 = sand.u32 %s35, 1
        %s346 = scalar_lea.sflag [#allocation3], %s345
        %s347 = sand.u32 %s35, 1
        %s348 = smul.addr %s347, 32
        %s349 = scalar_lea.vmem [#allocation2], %s348
        %p350 = pneg %p48
        %p351 = pneg %p45
        %p352 = pneg %p69
        %p353 = pneg %p66
        %p354 = pneg %p90
        %p355 = pneg %p87
        %p356 = pneg %p111
        %p357 = pneg %p108
        %p358 = pneg %p132
        %p359 = pneg %p129
        %p360 = pneg %p153
        %p361 = pneg %p150
        %p362 = pneg %p174
        %p363 = pneg %p171
        %p364 = pneg %p200
        %p365 = pneg %p197
        %s366 = sand.u32 %s187, 1
        %s367 = scalar_lea.sflag [#allocation4], %s366
        %s368 = sand.u32 %s187, 1
        %s369 = smul.addr %s368, 32
        %s370 = scalar_lea.vmem [#allocation13], %s369
        %s371 = smul.u32 4, %s27
        %s372 = smul.u32 4, %s27
        %v374 = vld [vmem:[%s320] sm:$0xf]
        %v375 = vld [vmem:[%s320 + $0x4] sm:$0xf]
        %v376 = vld [vmem:[%s320 + $0x8] sm:$0xf]
        %v377 = vld [vmem:[%s320 + $0xc] sm:$0xf]
        %v378 = vld [vmem:[%s320 + $0x10] sm:$0xf]
        %v379 = vld [vmem:[%s320 + $0x14] sm:$0xf]
        %v380 = vld [vmem:[%s320 + $0x18] sm:$0xf]
        %v381 = vld [vmem:[%s320 + $0x1c] sm:$0xf]
        %v382 = vld [vmem:[#allocation5] sm:$0xf]
        %v383 = vld [vmem:[#allocation5 + $0x4] sm:$0xf]
        %v384 = vld [vmem:[#allocation5 + $0x8] sm:$0xf]
        %v385 = vld [vmem:[#allocation5 + $0xc] sm:$0xf]
        %v394 = vunpack.c.l.b16 %v374
        %v395 = vunpack.c.l.b16 %v375
        %v396 = vunpack.c.l.b16 %v376
        %v397 = vunpack.c.l.b16 %v377
        %v398 = vunpack.c.l.b16 %v378
        %v399 = vunpack.c.l.b16 %v379
        %v400 = vunpack.c.l.b16 %v380
        %v401 = vunpack.c.l.b16 %v381
        %v402 = vpack.c.b16 %v395, %v394
        %v403 = vpack.c.b16 %v397, %v396
        %v404 = vpack.c.b16 %v399, %v398
        %v405 = vpack.c.b16 %v401, %v400
        %v410 = vunpack.c.l.b16 %v382
        %v411 = vunpack.c.l.b16 %v383
        %v412 = vunpack.c.l.b16 %v384
        %v413 = vunpack.c.l.b16 %v385
        %v414 = vpack.c.b16 %v411, %v410
        %v415 = vpack.c.b16 %v413, %v412
        %vm418 = vcmask 261120
        %v420 = vsel %vm418, %v402, 0
        %v423 = vsel %vm418, %v403, 0
        %v426 = vsel %vm418, %v404, 0
        %v429 = vsel %vm418, %v405, 0
        %431 = vmatprep.subr.bf16.mxu0 0
        %432 = vmatpush1.bf16.msra.mxu0 0
        %433 = vmatprep.subr.bf16.mxu0 0
        %434 = vmatpush1.bf16.msra.mxu0 0
        %435 = vmatprep.subr.bf16.mxu0 0
        %436 = vmatpush1.bf16.msra.mxu0 0
        %437 = vmatprep.subr.bf16.mxu0 0
        %438 = vmatpush1.bf16.msra.mxu0 0
        %439 = vmatprep.subr.bf16.mxu0 0
        %440 = vmatpush1.bf16.msra.mxu0 0
        %441 = vmatprep.subr.bf16.mxu0 0
        %442 = vmatpush1.bf16.msra.mxu0 0
        %443 = vmatprep.subr.bf16.mxu0 0
        %444 = vmatpush1.bf16.msra.mxu0 %v415
        %445 = vmatprep.subr.bf16.mxu0 0
        %446 = vmatpush1.bf16.msra.mxu0 %v414
        %447 = vmatprep.subr.bf16.mxu0 0
        %448 = vmatpush2.bf16.msra.mxu0 0
        %449 = vmatprep.subr.bf16.mxu0 0
        %450 = vmatpush2.bf16.msra.mxu0 0
        %451 = vmatprep.subr.bf16.mxu0 0
        %452 = vmatpush2.bf16.msra.mxu0 0
        %453 = vmatprep.subr.bf16.mxu0 0
        %454 = vmatpush2.bf16.msra.mxu0 0
        %455 = vmatprep.subr.bf16.mxu0 0
        %456 = vmatpush2.bf16.msra.mxu0 0
        %457 = vmatprep.subr.bf16.mxu0 0
        %458 = vmatpush2.bf16.msra.mxu0 0
        %459 = vmatprep.subr.bf16.mxu0 0
        %460 = vmatpush2.bf16.msra.mxu0 0
        %461 = vmatprep.subr.bf16.mxu0 0
        %462 = vmatpush2.bf16.msra.mxu0 0
        %463 = vmatprep.mubr.bf16.mxu0 0
        %464 = vmatmul.mubr.bf16.gmra.mxu0 %v420
        %v465 = vpop.f32.mrf.mxu0
        %v466 = vadd.f32 0.0, %v465
        %v467 = vpop.f32.mrf.mxu0
        %v468 = vpop.f32.mrf.mxu0
        %v469 = vadd.f32 0.0, %v468
        %v470 = vpop.f32.mrf.mxu0
        %471 = vmatprep.mubr.bf16.mxu0 0
        %472 = vmatmul.mubr.bf16.gmra.mxu0 %v423
        %v473 = vpop.f32.mrf.mxu0
        %v474 = vadd.f32 0.0, %v473
        %v475 = vpop.f32.mrf.mxu0
        %v476 = vpop.f32.mrf.mxu0
        %v477 = vadd.f32 0.0, %v476
        %v478 = vpop.f32.mrf.mxu0
        %479 = vmatprep.mubr.bf16.mxu0 0
        %480 = vmatmul.mubr.bf16.gmra.mxu0 %v426
        %v481 = vpop.f32.mrf.mxu0
        %v482 = vadd.f32 0.0, %v481
        %v483 = vpop.f32.mrf.mxu0
        %v484 = vpop.f32.mrf.mxu0
        %v485 = vadd.f32 0.0, %v484
        %v486 = vpop.f32.mrf.mxu0
        %487 = vmatprep.mubr.bf16.mxu0 0
        %488 = vmatmul.mubr.bf16.gmra.mxu0 %v429
        %v489 = vpop.f32.mrf.mxu0
        %v490 = vadd.f32 0.0, %v489
        %v491 = vpop.f32.mrf.mxu0
        %v492 = vpop.f32.mrf.mxu0
        %v493 = vadd.f32 0.0, %v492
        %v494 = vpop.f32.mrf.mxu0
        %495 = vdwg.mxu0
        %v496 = vld [vmem:[#allocation7] sm:$0xf]
        %v497 = vld [vmem:[#allocation7 + $0x4] sm:$0xf]
        %v498 = vld [vmem:[#allocation7 + $0x8] sm:$0xf]
        %v499 = vld [vmem:[#allocation7 + $0xc] sm:$0xf]
        %v504 = vunpack.c.l.b16 %v496
        %v505 = vunpack.c.l.b16 %v497
        %v506 = vunpack.c.l.b16 %v498
        %v507 = vunpack.c.l.b16 %v499
        %v508 = vpack.c.b16 %v505, %v504
        %v509 = vpack.c.b16 %v507, %v506
        %512 = vmatprep.subr.bf16.mxu0 0
        %513 = vmatpush1.bf16.msra.mxu0 0
        %514 = vmatprep.subr.bf16.mxu0 0
        %515 = vmatpush1.bf16.msra.mxu0 0
        %516 = vmatprep.subr.bf16.mxu0 0
        %517 = vmatpush1.bf16.msra.mxu0 0
        %518 = vmatprep.subr.bf16.mxu0 0
        %519 = vmatpush1.bf16.msra.mxu0 0
        %520 = vmatprep.subr.bf16.mxu0 0
        %521 = vmatpush1.bf16.msra.mxu0 0
        %522 = vmatprep.subr.bf16.mxu0 0
        %523 = vmatpush1.bf16.msra.mxu0 0
        %524 = vmatprep.subr.bf16.mxu0 0
        %525 = vmatpush1.bf16.msra.mxu0 %v509
        %526 = vmatprep.subr.bf16.mxu0 0
        %527 = vmatpush1.bf16.msra.mxu0 %v508
        %528 = vmatprep.subr.bf16.mxu0 0
        %529 = vmatpush2.bf16.msra.mxu0 0
        %530 = vmatprep.subr.bf16.mxu0 0
        %531 = vmatpush2.bf16.msra.mxu0 0
        %532 = vmatprep.subr.bf16.mxu0 0
        %533 = vmatpush2.bf16.msra.mxu0 0
        %534 = vmatprep.subr.bf16.mxu0 0
        %535 = vmatpush2.bf16.msra.mxu0 0
        %536 = vmatprep.subr.bf16.mxu0 0
        %537 = vmatpush2.bf16.msra.mxu0 0
        %538 = vmatprep.subr.bf16.mxu0 0
        %539 = vmatpush2.bf16.msra.mxu0 0
        %540 = vmatprep.subr.bf16.mxu0 0
        %541 = vmatpush2.bf16.msra.mxu0 0
        %542 = vmatprep.subr.bf16.mxu0 0
        %543 = vmatpush2.bf16.msra.mxu0 0
        %544 = vmatprep.mubr.bf16.mxu0 0
        %545 = vmatmul.mubr.bf16.gmra.mxu0 %v420
        %v546 = vpop.f32.mrf.mxu0
        %v547 = vadd.f32 0.0, %v546
        %v548 = vpop.f32.mrf.mxu0
        %v549 = vpop.f32.mrf.mxu0
        %v550 = vadd.f32 0.0, %v549
        %v551 = vpop.f32.mrf.mxu0
        %552 = vmatprep.mubr.bf16.mxu0 0
        %553 = vmatmul.mubr.bf16.gmra.mxu0 %v423
        %v554 = vpop.f32.mrf.mxu0
        %v555 = vadd.f32 0.0, %v554
        %v556 = vpop.f32.mrf.mxu0
        %v557 = vpop.f32.mrf.mxu0
        %v558 = vadd.f32 0.0, %v557
        %v559 = vpop.f32.mrf.mxu0
        %560 = vmatprep.mubr.bf16.mxu0 0
        %561 = vmatmul.mubr.bf16.gmra.mxu0 %v426
        %v562 = vpop.f32.mrf.mxu0
        %v563 = vadd.f32 0.0, %v562
        %v564 = vpop.f32.mrf.mxu0
        %v565 = vpop.f32.mrf.mxu0
        %v566 = vadd.f32 0.0, %v565
        %v567 = vpop.f32.mrf.mxu0
        %568 = vmatprep.mubr.bf16.mxu0 0
        %569 = vmatmul.mubr.bf16.gmra.mxu0 %v429
        %v570 = vpop.f32.mrf.mxu0
        %v571 = vadd.f32 0.0, %v570
        %v572 = vpop.f32.mrf.mxu0
        %v573 = vpop.f32.mrf.mxu0
        %v574 = vadd.f32 0.0, %v573
        %v575 = vpop.f32.mrf.mxu0
        %576 = vdwg.mxu0
        %v577 = vld [vmem:[#allocation8] sm:$0xf]
        %v578 = vld [vmem:[#allocation8 + $0x4] sm:$0xf]
        %v579 = vld [vmem:[#allocation8 + $0x8] sm:$0xf]
        %v580 = vld [vmem:[#allocation8 + $0xc] sm:$0xf]
        %v585 = vunpack.c.l.b16 %v577
        %v586 = vunpack.c.l.b16 %v578
        %v587 = vunpack.c.l.b16 %v579
        %v588 = vunpack.c.l.b16 %v580
        %v589 = vpack.c.b16 %v586, %v585
        %v590 = vpack.c.b16 %v588, %v587
        %593 = vmatprep.subr.bf16.mxu0 0
        %594 = vmatpush1.bf16.msra.mxu0 0
        %595 = vmatprep.subr.bf16.mxu0 0
        %596 = vmatpush1.bf16.msra.mxu0 0
        %597 = vmatprep.subr.bf16.mxu0 0
        %598 = vmatpush1.bf16.msra.mxu0 0
        %599 = vmatprep.subr.bf16.mxu0 0
        %600 = vmatpush1.bf16.msra.mxu0 0
        %601 = vmatprep.subr.bf16.mxu0 0
        %602 = vmatpush1.bf16.msra.mxu0 0
        %603 = vmatprep.subr.bf16.mxu0 0
        %604 = vmatpush1.bf16.msra.mxu0 0
        %605 = vmatprep.subr.bf16.mxu0 0
        %606 = vmatpush1.bf16.msra.mxu0 %v590
        %607 = vmatprep.subr.bf16.mxu0 0
        %608 = vmatpush1.bf16.msra.mxu0 %v589
        %609 = vmatprep.subr.bf16.mxu0 0
        %610 = vmatpush2.bf16.msra.mxu0 0
        %611 = vmatprep.subr.bf16.mxu0 0
        %612 = vmatpush2.bf16.msra.mxu0 0
        %613 = vmatprep.subr.bf16.mxu0 0
        %614 = vmatpush2.bf16.msra.mxu0 0
        %615 = vmatprep.subr.bf16.mxu0 0
        %616 = vmatpush2.bf16.msra.mxu0 0
        %617 = vmatprep.subr.bf16.mxu0 0
        %618 = vmatpush2.bf16.msra.mxu0 0
        %619 = vmatprep.subr.bf16.mxu0 0
        %620 = vmatpush2.bf16.msra.mxu0 0
        %621 = vmatprep.subr.bf16.mxu0 0
        %622 = vmatpush2.bf16.msra.mxu0 0
        %623 = vmatprep.subr.bf16.mxu0 0
        %624 = vmatpush2.bf16.msra.mxu0 0
        %625 = vmatprep.mubr.bf16.mxu0 0
        %626 = vmatmul.mubr.bf16.gmra.mxu0 %v420
        %v627 = vpop.f32.mrf.mxu0
        %v628 = vadd.f32 0.0, %v627
        %v629 = vpop.f32.mrf.mxu0
        %v630 = vpop.f32.mrf.mxu0
        %v631 = vadd.f32 0.0, %v630
        %v632 = vpop.f32.mrf.mxu0
        %633 = vmatprep.mubr.bf16.mxu0 0
        %634 = vmatmul.mubr.bf16.gmra.mxu0 %v423
        %v635 = vpop.f32.mrf.mxu0
        %v636 = vadd.f32 0.0, %v635
        %v637 = vpop.f32.mrf.mxu0
        %v638 = vpop.f32.mrf.mxu0
        %v639 = vadd.f32 0.0, %v638
        %v640 = vpop.f32.mrf.mxu0
        %641 = vmatprep.mubr.bf16.mxu0 0
        %642 = vmatmul.mubr.bf16.gmra.mxu0 %v426
        %v643 = vpop.f32.mrf.mxu0
        %v644 = vadd.f32 0.0, %v643
        %v645 = vpop.f32.mrf.mxu0
        %v646 = vpop.f32.mrf.mxu0
        %v647 = vadd.f32 0.0, %v646
        %v648 = vpop.f32.mrf.mxu0
        %649 = vmatprep.mubr.bf16.mxu0 0
        %650 = vmatmul.mubr.bf16.gmra.mxu0 %v429
        %v651 = vpop.f32.mrf.mxu0
        %v652 = vadd.f32 0.0, %v651
        %v653 = vpop.f32.mrf.mxu0
        %v654 = vpop.f32.mrf.mxu0
        %v655 = vadd.f32 0.0, %v654
        %v656 = vpop.f32.mrf.mxu0
        %657 = vdwg.mxu0
        %v658 = vpack.c.bf16 %v469, %v466
        %v659 = vpack.c.bf16 %v477, %v474
        %v660 = vpack.c.bf16 %v485, %v482
        %v661 = vpack.c.bf16 %v493, %v490
        %666 = vrot.lane.b32.xlu0 %v658, 120
        %v667 = vpop.permute.xlu0 %666
        %668 = vrot.lane.b32.xlu0 %v659, 120
        %v669 = vpop.permute.xlu0 %668
        %670 = vrot.lane.b32.xlu0 %v660, 120
        %v671 = vpop.permute.xlu0 %670
        %672 = vrot.lane.b32.xlu0 %v661, 120
        %v673 = vpop.permute.xlu0 %672
        %674 = vrot.lane.b32.xlu0 %v658, 112
        %v675 = vpop.permute.xlu0 %674
        %676 = vrot.lane.b32.xlu0 %v659, 112
        %v677 = vpop.permute.xlu0 %676
        %678 = vrot.lane.b32.xlu0 %v660, 112
        %v679 = vpop.permute.xlu0 %678
        %680 = vrot.lane.b32.xlu0 %v661, 112
        %v681 = vpop.permute.xlu0 %680
        %682 = vrot.lane.b32.xlu0 %v658, 104
        %v683 = vpop.permute.xlu0 %682
        %684 = vrot.lane.b32.xlu0 %v659, 104
        %v685 = vpop.permute.xlu0 %684
        %686 = vrot.lane.b32.xlu0 %v660, 104
        %v687 = vpop.permute.xlu0 %686
        %688 = vrot.lane.b32.xlu0 %v661, 104
        %v689 = vpop.permute.xlu0 %688
        %v690 = vpack.c.bf16 %v550, %v547
        %v691 = vpack.c.bf16 %v558, %v555
        %v692 = vpack.c.bf16 %v566, %v563
        %v693 = vpack.c.bf16 %v574, %v571
        %698 = vrot.lane.b32.xlu0 %v690, 120
        %v699 = vpop.permute.xlu0 %698
        %700 = vrot.lane.b32.xlu0 %v691, 120
        %v701 = vpop.permute.xlu0 %700
        %702 = vrot.lane.b32.xlu0 %v692, 120
        %v703 = vpop.permute.xlu0 %702
        %704 = vrot.lane.b32.xlu0 %v693, 120
        %v705 = vpop.permute.xlu0 %704
        %706 = vrot.lane.b32.xlu0 %v690, 112
        %v707 = vpop.permute.xlu0 %706
        %708 = vrot.lane.b32.xlu0 %v691, 112
        %v709 = vpop.permute.xlu0 %708
        %710 = vrot.lane.b32.xlu0 %v692, 112
        %v711 = vpop.permute.xlu0 %710
        %712 = vrot.lane.b32.xlu0 %v693, 112
        %v713 = vpop.permute.xlu0 %712
        %714 = vrot.lane.b32.xlu0 %v690, 104
        %v715 = vpop.permute.xlu0 %714
        %716 = vrot.lane.b32.xlu0 %v691, 104
        %v717 = vpop.permute.xlu0 %716
        %718 = vrot.lane.b32.xlu0 %v692, 104
        %v719 = vpop.permute.xlu0 %718
        %720 = vrot.lane.b32.xlu0 %v693, 104
        %v721 = vpop.permute.xlu0 %720
        %v722 = vpack.c.bf16 %v631, %v628
        %v723 = vpack.c.bf16 %v639, %v636
        %v724 = vpack.c.bf16 %v647, %v644
        %v725 = vpack.c.bf16 %v655, %v652
        %730 = vrot.lane.b32.xlu0 %v722, 120
        %v731 = vpop.permute.xlu0 %730
        %732 = vrot.lane.b32.xlu0 %v723, 120
        %v733 = vpop.permute.xlu0 %732
        %734 = vrot.lane.b32.xlu0 %v724, 120
        %v735 = vpop.permute.xlu0 %734
        %736 = vrot.lane.b32.xlu0 %v725, 120
        %v737 = vpop.permute.xlu0 %736
        %742 = vrot.lane.b32.xlu0 %v722, 112
        %v743 = vpop.permute.xlu0 %742
        %744 = vrot.lane.b32.xlu0 %v723, 112
        %v745 = vpop.permute.xlu0 %744
        %746 = vrot.lane.b32.xlu0 %v724, 112
        %v747 = vpop.permute.xlu0 %746
        %748 = vrot.lane.b32.xlu0 %v725, 112
        %v749 = vpop.permute.xlu0 %748
        %754 = vrot.lane.b32.xlu0 %v722, 104
        %v755 = vpop.permute.xlu0 %754
        %756 = vrot.lane.b32.xlu0 %v723, 104
        %v757 = vpop.permute.xlu0 %756
        %758 = vrot.lane.b32.xlu0 %v724, 104
        %v759 = vpop.permute.xlu0 %758
        %760 = vrot.lane.b32.xlu0 %v725, 104
        %v761 = vpop.permute.xlu0 %760
        %vm766 = vcmask 64512
        %v768 = vsel %vm766, %v658, 0
        %v771 = vsel %vm766, %v690, 0
        %773 = vmatprep.subr.bf16.mxu0 0
        %774 = vmatpush1.bf16.xpose.msra.mxu0 0
        %775 = vmatprep.subr.bf16.mxu0 0
        %776 = vmatpush1.bf16.xpose.msra.mxu0 0
        %777 = vmatprep.subr.bf16.mxu0 0
        %778 = vmatpush1.bf16.xpose.msra.mxu0 0
        %779 = vmatprep.subr.bf16.mxu0 0
        %780 = vmatpush1.bf16.xpose.msra.mxu0 0
        %781 = vmatprep.subr.bf16.mxu0 0
        %782 = vmatpush1.bf16.xpose.msra.mxu0 0
        %783 = vmatprep.subr.bf16.mxu0 0
        %784 = vmatpush1.bf16.xpose.msra.mxu0 0
        %785 = vmatprep.subr.bf16.mxu0 0
        %786 = vmatpush1.bf16.xpose.msra.mxu0 0
        %787 = vmatprep.subr.bf16.mxu0 0
        %788 = vmatpush1.bf16.xpose.msra.mxu0 %v771
        %789 = vmatprep.subr.bf16.mxu0 0
        %790 = vmatpush2.bf16.xpose.msra.mxu0 0
        %791 = vmatprep.subr.bf16.mxu0 0
        %792 = vmatpush2.bf16.xpose.msra.mxu0 0
        %793 = vmatprep.subr.bf16.mxu0 0
        %794 = vmatpush2.bf16.xpose.msra.mxu0 0
        %795 = vmatprep.subr.bf16.mxu0 0
        %796 = vmatpush2.bf16.xpose.msra.mxu0 0
        %797 = vmatprep.subr.bf16.mxu0 0
        %798 = vmatpush2.bf16.xpose.msra.mxu0 0
        %799 = vmatprep.subr.bf16.mxu0 0
        %800 = vmatpush2.bf16.xpose.msra.mxu0 0
        %801 = vmatprep.subr.bf16.mxu0 0
        %802 = vmatpush2.bf16.xpose.msra.mxu0 0
        %803 = vmatprep.subr.bf16.mxu0 0
        %804 = vmatpush2.bf16.xpose.msra.mxu0 0
        %805 = vmatprep.mubr.bf16.mxu0 0
        %806 = vmatmul.mubr.bf16.gmra.mxu0 %v768
        %v807 = vpop.f32.mrf.mxu0
        %v808 = vadd.f32 0.0, %v807
        %v809 = vpop.f32.mrf.mxu0
        %v810 = vpop.f32.mrf.mxu0
        %v811 = vadd.f32 0.0, %v810
        %v812 = vpop.f32.mrf.mxu0
        %813 = vdwg.mxu0
        %v815 = vsel %vm766, %v659, 0
        %v818 = vsel %vm766, %v691, 0
        %820 = vmatprep.subr.bf16.mxu0 0
        %821 = vmatpush1.bf16.xpose.msra.mxu0 0
        %822 = vmatprep.subr.bf16.mxu0 0
        %823 = vmatpush1.bf16.xpose.msra.mxu0 0
        %824 = vmatprep.subr.bf16.mxu0 0
        %825 = vmatpush1.bf16.xpose.msra.mxu0 0
        %826 = vmatprep.subr.bf16.mxu0 0
        %827 = vmatpush1.bf16.xpose.msra.mxu0 0
        %828 = vmatprep.subr.bf16.mxu0 0
        %829 = vmatpush1.bf16.xpose.msra.mxu0 0
        %830 = vmatprep.subr.bf16.mxu0 0
        %831 = vmatpush1.bf16.xpose.msra.mxu0 0
        %832 = vmatprep.subr.bf16.mxu0 0
        %833 = vmatpush1.bf16.xpose.msra.mxu0 0
        %834 = vmatprep.subr.bf16.mxu0 0
        %835 = vmatpush1.bf16.xpose.msra.mxu0 %v818
        %836 = vmatprep.subr.bf16.mxu0 0
        %837 = vmatpush2.bf16.xpose.msra.mxu0 0
        %838 = vmatprep.subr.bf16.mxu0 0
        %839 = vmatpush2.bf16.xpose.msra.mxu0 0
        %840 = vmatprep.subr.bf16.mxu0 0
        %841 = vmatpush2.bf16.xpose.msra.mxu0 0
        %842 = vmatprep.subr.bf16.mxu0 0
        %843 = vmatpush2.bf16.xpose.msra.mxu0 0
        %844 = vmatprep.subr.bf16.mxu0 0
        %845 = vmatpush2.bf16.xpose.msra.mxu0 0
        %846 = vmatprep.subr.bf16.mxu0 0
        %847 = vmatpush2.bf16.xpose.msra.mxu0 0
        %848 = vmatprep.subr.bf16.mxu0 0
        %849 = vmatpush2.bf16.xpose.msra.mxu0 0
        %850 = vmatprep.subr.bf16.mxu0 0
        %851 = vmatpush2.bf16.xpose.msra.mxu0 0
        %852 = vmatprep.mubr.bf16.mxu0 0
        %853 = vmatmul.mubr.bf16.gmra.mxu0 %v815
        %v854 = vpop.f32.mrf.mxu0
        %v855 = vadd.f32 0.0, %v854
        %v856 = vpop.f32.mrf.mxu0
        %v857 = vpop.f32.mrf.mxu0
        %v858 = vadd.f32 0.0, %v857
        %v859 = vpop.f32.mrf.mxu0
        %860 = vdwg.mxu0
        %v862 = vsel %vm766, %v660, 0
        %v865 = vsel %vm766, %v692, 0
        %867 = vmatprep.subr.bf16.mxu0 0
        %868 = vmatpush1.bf16.xpose.msra.mxu0 0
        %869 = vmatprep.subr.bf16.mxu0 0
        %870 = vmatpush1.bf16.xpose.msra.mxu0 0
        %871 = vmatprep.subr.bf16.mxu0 0
        %872 = vmatpush1.bf16.xpose.msra.mxu0 0
        %873 = vmatprep.subr.bf16.mxu0 0
        %874 = vmatpush1.bf16.xpose.msra.mxu0 0
        %875 = vmatprep.subr.bf16.mxu0 0
        %876 = vmatpush1.bf16.xpose.msra.mxu0 0
        %877 = vmatprep.subr.bf16.mxu0 0
        %878 = vmatpush1.bf16.xpose.msra.mxu0 0
        %879 = vmatprep.subr.bf16.mxu0 0
        %880 = vmatpush1.bf16.xpose.msra.mxu0 0
        %881 = vmatprep.subr.bf16.mxu0 0
        %882 = vmatpush1.bf16.xpose.msra.mxu0 %v865
        %883 = vmatprep.subr.bf16.mxu0 0
        %884 = vmatpush2.bf16.xpose.msra.mxu0 0
        %885 = vmatprep.subr.bf16.mxu0 0
        %886 = vmatpush2.bf16.xpose.msra.mxu0 0
        %887 = vmatprep.subr.bf16.mxu0 0
        %888 = vmatpush2.bf16.xpose.msra.mxu0 0
        %889 = vmatprep.subr.bf16.mxu0 0
        %890 = vmatpush2.bf16.xpose.msra.mxu0 0
        %891 = vmatprep.subr.bf16.mxu0 0
        %892 = vmatpush2.bf16.xpose.msra.mxu0 0
        %893 = vmatprep.subr.bf16.mxu0 0
        %894 = vmatpush2.bf16.xpose.msra.mxu0 0
        %895 = vmatprep.subr.bf16.mxu0 0
        %896 = vmatpush2.bf16.xpose.msra.mxu0 0
        %897 = vmatprep.subr.bf16.mxu0 0
        %898 = vmatpush2.bf16.xpose.msra.mxu0 0
        %899 = vmatprep.mubr.bf16.mxu0 0
        %900 = vmatmul.mubr.bf16.gmra.mxu0 %v862
        %v901 = vpop.f32.mrf.mxu0
        %v902 = vadd.f32 0.0, %v901
        %v903 = vpop.f32.mrf.mxu0
        %v904 = vpop.f32.mrf.mxu0
        %v905 = vadd.f32 0.0, %v904
        %v906 = vpop.f32.mrf.mxu0
        %907 = vdwg.mxu0
        %v909 = vsel %vm766, %v661, 0
        %v912 = vsel %vm766, %v693, 0
        %914 = vmatprep.subr.bf16.mxu0 0
        %915 = vmatpush1.bf16.xpose.msra.mxu0 0
        %916 = vmatprep.subr.bf16.mxu0 0
        %917 = vmatpush1.bf16.xpose.msra.mxu0 0
        %918 = vmatprep.subr.bf16.mxu0 0
        %919 = vmatpush1.bf16.xpose.msra.mxu0 0
        %920 = vmatprep.subr.bf16.mxu0 0
        %921 = vmatpush1.bf16.xpose.msra.mxu0 0
        %922 = vmatprep.subr.bf16.mxu0 0
        %923 = vmatpush1.bf16.xpose.msra.mxu0 0
        %924 = vmatprep.subr.bf16.mxu0 0
        %925 = vmatpush1.bf16.xpose.msra.mxu0 0
        %926 = vmatprep.subr.bf16.mxu0 0
        %927 = vmatpush1.bf16.xpose.msra.mxu0 0
        %928 = vmatprep.subr.bf16.mxu0 0
        %929 = vmatpush1.bf16.xpose.msra.mxu0 %v912
        %930 = vmatprep.subr.bf16.mxu0 0
        %931 = vmatpush2.bf16.xpose.msra.mxu0 0
        %932 = vmatprep.subr.bf16.mxu0 0
        %933 = vmatpush2.bf16.xpose.msra.mxu0 0
        %934 = vmatprep.subr.bf16.mxu0 0
        %935 = vmatpush2.bf16.xpose.msra.mxu0 0
        %936 = vmatprep.subr.bf16.mxu0 0
        %937 = vmatpush2.bf16.xpose.msra.mxu0 0
        %938 = vmatprep.subr.bf16.mxu0 0
        %939 = vmatpush2.bf16.xpose.msra.mxu0 0
        %940 = vmatprep.subr.bf16.mxu0 0
        %941 = vmatpush2.bf16.xpose.msra.mxu0 0
        %942 = vmatprep.subr.bf16.mxu0 0
        %943 = vmatpush2.bf16.xpose.msra.mxu0 0
        %944 = vmatprep.subr.bf16.mxu0 0
        %945 = vmatpush2.bf16.xpose.msra.mxu0 0
        %946 = vmatprep.mubr.bf16.mxu0 0
        %947 = vmatmul.mubr.bf16.gmra.mxu0 %v909
        %v948 = vpop.f32.mrf.mxu0
        %v949 = vadd.f32 0.0, %v948
        %v950 = vpop.f32.mrf.mxu0
        %v951 = vpop.f32.mrf.mxu0
        %v952 = vadd.f32 0.0, %v951
        %v953 = vpop.f32.mrf.mxu0
        %954 = vdwg.mxu0
        %v956 = vsel %vm766, %v667, 0
        %v959 = vsel %vm766, %v699, 0
        %961 = vmatprep.subr.bf16.mxu0 0
        %962 = vmatpush1.bf16.xpose.msra.mxu0 0
        %963 = vmatprep.subr.bf16.mxu0 0
        %964 = vmatpush1.bf16.xpose.msra.mxu0 0
        %965 = vmatprep.subr.bf16.mxu0 0
        %966 = vmatpush1.bf16.xpose.msra.mxu0 0
        %967 = vmatprep.subr.bf16.mxu0 0
        %968 = vmatpush1.bf16.xpose.msra.mxu0 0
        %969 = vmatprep.subr.bf16.mxu0 0
        %970 = vmatpush1.bf16.xpose.msra.mxu0 0
        %971 = vmatprep.subr.bf16.mxu0 0
        %972 = vmatpush1.bf16.xpose.msra.mxu0 0
        %973 = vmatprep.subr.bf16.mxu0 0
        %974 = vmatpush1.bf16.xpose.msra.mxu0 0
        %975 = vmatprep.subr.bf16.mxu0 0
        %976 = vmatpush1.bf16.xpose.msra.mxu0 %v959
        %977 = vmatprep.subr.bf16.mxu0 0
        %978 = vmatpush2.bf16.xpose.msra.mxu0 0
        %979 = vmatprep.subr.bf16.mxu0 0
        %980 = vmatpush2.bf16.xpose.msra.mxu0 0
        %981 = vmatprep.subr.bf16.mxu0 0
        %982 = vmatpush2.bf16.xpose.msra.mxu0 0
        %983 = vmatprep.subr.bf16.mxu0 0
        %984 = vmatpush2.bf16.xpose.msra.mxu0 0
        %985 = vmatprep.subr.bf16.mxu0 0
        %986 = vmatpush2.bf16.xpose.msra.mxu0 0
        %987 = vmatprep.subr.bf16.mxu0 0
        %988 = vmatpush2.bf16.xpose.msra.mxu0 0
        %989 = vmatprep.subr.bf16.mxu0 0
        %990 = vmatpush2.bf16.xpose.msra.mxu0 0
        %991 = vmatprep.subr.bf16.mxu0 0
        %992 = vmatpush2.bf16.xpose.msra.mxu0 0
        %993 = vmatprep.mubr.bf16.mxu0 0
        %994 = vmatmul.mubr.bf16.gmra.mxu0 %v956
        %v995 = vpop.f32.mrf.mxu0
        %v996 = vadd.f32 0.0, %v995
        %v997 = vpop.f32.mrf.mxu0
        %v998 = vpop.f32.mrf.mxu0
        %v999 = vadd.f32 0.0, %v998
        %v1000 = vpop.f32.mrf.mxu0
        %1001 = vdwg.mxu0
        %v1003 = vsel %vm766, %v669, 0
        %v1006 = vsel %vm766, %v701, 0
        %1008 = vmatprep.subr.bf16.mxu0 0
        %1009 = vmatpush1.bf16.xpose.msra.mxu0 0
        %1010 = vmatprep.subr.bf16.mxu0 0
        %1011 = vmatpush1.bf16.xpose.msra.mxu0 0
        %1012 = vmatprep.subr.bf16.mxu0 0
        %1013 = vmatpush1.bf16.xpose.msra.mxu0 0
        %1014 = vmatprep.subr.bf16.mxu0 0
        %1015 = vmatpush1.bf16.xpose.msra.mxu0 0
        %1016 = vmatprep.subr.bf16.mxu0 0
        %1017 = vmatpush1.bf16.xpose.msra.mxu0 0
        %1018 = vmatprep.subr.bf16.mxu0 0
        %1019 = vmatpush1.bf16.xpose.msra.mxu0 0
        %1020 = vmatprep.subr.bf16.mxu0 0
        %1021 = vmatpush1.bf16.xpose.msra.mxu0 0
        %1022 = vmatprep.subr.bf16.mxu0 0
        %1023 = vmatpush1.bf16.xpose.msra.mxu0 %v1006
        %1024 = vmatprep.subr.bf16.mxu0 0
        %1025 = vmatpush2.bf16.xpose.msra.mxu0 0
        %1026 = vmatprep.subr.bf16.mxu0 0
        %1027 = vmatpush2.bf16.xpose.msra.mxu0 0
        %1028 = vmatprep.subr.bf16.mxu0 0
        %1029 = vmatpush2.bf16.xpose.msra.mxu0 0
        %1030 = vmatprep.subr.bf16.mxu0 0
        %1031 = vmatpush2.bf16.xpose.msra.mxu0 0
        %1032 = vmatprep.subr.bf16.mxu0 0
        %1033 = vmatpush2.bf16.xpose.msra.mxu0 0
        %1034 = vmatprep.subr.bf16.mxu0 0
        %1035 = vmatpush2.bf16.xpose.msra.mxu0 0
        %1036 = vmatprep.subr.bf16.mxu0 0
        %1037 = vmatpush2.bf16.xpose.msra.mxu0 0
        %1038 = vmatprep.subr.bf16.mxu0 0
        %1039 = vmatpush2.bf16.xpose.msra.mxu0 0
        %1040 = vmatprep.mubr.bf16.mxu0 0
        %1041 = vmatmul.mubr.bf16.gmra.mxu0 %v1003
        %v1042 = vpop.f32.mrf.mxu0
        %v1043 = vadd.f32 0.0, %v1042
        %v1044 = vpop.f32.mrf.mxu0
        %v1045 = vpop.f32.mrf.mxu0
        %v1046 = vadd.f32 0.0, %v1045
        %v1047 = vpop.f32.mrf.mxu0
        %1048 = vdwg.mxu0
        %v1050 = vsel %vm766, %v671, 0
        %v1053 = vsel %vm766, %v703, 0
        %1055 = vmatprep.subr.bf16.mxu0 0
        %1056 = vmatpush1.bf16.xpose.msra.mxu0 0
        %1057 = vmatprep.subr.bf16.mxu0 0
        %1058 = vmatpush1.bf16.xpose.msra.mxu0 0
        %1059 = vmatprep.subr.bf16.mxu0 0
        %1060 = vmatpush1.bf16.xpose.msra.mxu0 0
        %1061 = vmatprep.subr.bf16.mxu0 0
        %1062 = vmatpush1.bf16.xpose.msra.mxu0 0
        %1063 = vmatprep.subr.bf16.mxu0 0
        %1064 = vmatpush1.bf16.xpose.msra.mxu0 0
        %1065 = vmatprep.subr.bf16.mxu0 0
        %1066 = vmatpush1.bf16.xpose.msra.mxu0 0
        %1067 = vmatprep.subr.bf16.mxu0 0
        %1068 = vmatpush1.bf16.xpose.msra.mxu0 0
        %1069 = vmatprep.subr.bf16.mxu0 0
        %1070 = vmatpush1.bf16.xpose.msra.mxu0 %v1053
        %1071 = vmatprep.subr.bf16.mxu0 0
        %1072 = vmatpush2.bf16.xpose.msra.mxu0 0
        %1073 = vmatprep.subr.bf16.mxu0 0
        %1074 = vmatpush2.bf16.xpose.msra.mxu0 0
        %1075 = vmatprep.subr.bf16.mxu0 0
        %1076 = vmatpush2.bf16.xpose.msra.mxu0 0
        %1077 = vmatprep.subr.bf16.mxu0 0
        %1078 = vmatpush2.bf16.xpose.msra.mxu0 0
        %1079 = vmatprep.subr.bf16.mxu0 0
        %1080 = vmatpush2.bf16.xpose.msra.mxu0 0
        %1081 = vmatprep.subr.bf16.mxu0 0
        %1082 = vmatpush2.bf16.xpose.msra.mxu0 0
        %1083 = vmatprep.subr.bf16.mxu0 0
        %1084 = vmatpush2.bf16.xpose.msra.mxu0 0
        %1085 = vmatprep.subr.bf16.mxu0 0
        %1086 = vmatpush2.bf16.xpose.msra.mxu0 0
        %1087 = vmatprep.mubr.bf16.mxu0 0
        %1088 = vmatmul.mubr.bf16.gmra.mxu0 %v1050
        %v1089 = vpop.f32.mrf.mxu0
        %v1090 = vadd.f32 0.0, %v1089
        %v1091 = vpop.f32.mrf.mxu0
        %v1092 = vpop.f32.mrf.mxu0
        %v1093 = vadd.f32 0.0, %v1092
        %v1094 = vpop.f32.mrf.mxu0
        %1095 = vdwg.mxu0
        %v1097 = vsel %vm766, %v673, 0
        %v1100 = vsel %vm766, %v705, 0
        %1102 = vmatprep.subr.bf16.mxu0 0
        %1103 = vmatpush1.bf16.xpose.msra.mxu0 0
        %1104 = vmatprep.subr.bf16.mxu0 0
        %1105 = vmatpush1.bf16.xpose.msra.mxu0 0
        %1106 = vmatprep.subr.bf16.mxu0 0
        %1107 = vmatpush1.bf16.xpose.msra.mxu0 0
        %1108 = vmatprep.subr.bf16.mxu0 0
        %1109 = vmatpush1.bf16.xpose.msra.mxu0 0
        %1110 = vmatprep.subr.bf16.mxu0 0
        %1111 = vmatpush1.bf16.xpose.msra.mxu0 0
        %1112 = vmatprep.subr.bf16.mxu0 0
        %1113 = vmatpush1.bf16.xpose.msra.mxu0 0
        %1114 = vmatprep.subr.bf16.mxu0 0
        %1115 = vmatpush1.bf16.xpose.msra.mxu0 0
        %1116 = vmatprep.subr.bf16.mxu0 0
        %1117 = vmatpush1.bf16.xpose.msra.mxu0 %v1100
        %1118 = vmatprep.subr.bf16.mxu0 0
        %1119 = vmatpush2.bf16.xpose.msra.mxu0 0
        %1120 = vmatprep.subr.bf16.mxu0 0
        %1121 = vmatpush2.bf16.xpose.msra.mxu0 0
        %1122 = vmatprep.subr.bf16.mxu0 0
        %1123 = vmatpush2.bf16.xpose.msra.mxu0 0
        %1124 = vmatprep.subr.bf16.mxu0 0
        %1125 = vmatpush2.bf16.xpose.msra.mxu0 0
        %1126 = vmatprep.subr.bf16.mxu0 0
        %1127 = vmatpush2.bf16.xpose.msra.mxu0 0
        %1128 = vmatprep.subr.bf16.mxu0 0
        %1129 = vmatpush2.bf16.xpose.msra.mxu0 0
        %1130 = vmatprep.subr.bf16.mxu0 0
        %1131 = vmatpush2.bf16.xpose.msra.mxu0 0
        %1132 = vmatprep.subr.bf16.mxu0 0
        %1133 = vmatpush2.bf16.xpose.msra.mxu0 0
        %1134 = vmatprep.mubr.bf16.mxu0 0
        %1135 = vmatmul.mubr.bf16.gmra.mxu0 %v1097
        %v1136 = vpop.f32.mrf.mxu0
        %v1137 = vadd.f32 0.0, %v1136
        %v1138 = vpop.f32.mrf.mxu0
        %v1139 = vpop.f32.mrf.mxu0
        %v1140 = vadd.f32 0.0, %v1139
        %v1141 = vpop.f32.mrf.mxu0
        %1142 = vdwg.mxu0
        %v1144 = vsel %vm766, %v675, 0
        %v1147 = vsel %vm766, %v707, 0
        %1149 = vmatprep.subr.bf16.mxu0 0
        %1150 = vmatpush1.bf16.xpose.msra.mxu0 0
        %1151 = vmatprep.subr.bf16.mxu0 0
        %1152 = vmatpush1.bf16.xpose.msra.mxu0 0
        %1153 = vmatprep.subr.bf16.mxu0 0
        %1154 = vmatpush1.bf16.xpose.msra.mxu0 0
        %1155 = vmatprep.subr.bf16.mxu0 0
        %1156 = vmatpush1.bf16.xpose.msra.mxu0 0
        %1157 = vmatprep.subr.bf16.mxu0 0
        %1158 = vmatpush1.bf16.xpose.msra.mxu0 0
        %1159 = vmatprep.subr.bf16.mxu0 0
        %1160 = vmatpush1.bf16.xpose.msra.mxu0 0
        %1161 = vmatprep.subr.bf16.mxu0 0
        %1162 = vmatpush1.bf16.xpose.msra.mxu0 0
        %1163 = vmatprep.subr.bf16.mxu0 0
        %1164 = vmatpush1.bf16.xpose.msra.mxu0 %v1147
        %1165 = vmatprep.subr.bf16.mxu0 0
        %1166 = vmatpush2.bf16.xpose.msra.mxu0 0
        %1167 = vmatprep.subr.bf16.mxu0 0
        %1168 = vmatpush2.bf16.xpose.msra.mxu0 0
        %1169 = vmatprep.subr.bf16.mxu0 0
        %1170 = vmatpush2.bf16.xpose.msra.mxu0 0
        %1171 = vmatprep.subr.bf16.mxu0 0
        %1172 = vmatpush2.bf16.xpose.msra.mxu0 0
        %1173 = vmatprep.subr.bf16.mxu0 0
        %1174 = vmatpush2.bf16.xpose.msra.mxu0 0
        %1175 = vmatprep.subr.bf16.mxu0 0
        %1176 = vmatpush2.bf16.xpose.msra.mxu0 0
        %1177 = vmatprep.subr.bf16.mxu0 0
        %1178 = vmatpush2.bf16.xpose.msra.mxu0 0
        %1179 = vmatprep.subr.bf16.mxu0 0
        %1180 = vmatpush2.bf16.xpose.msra.mxu0 0
        %1181 = vmatprep.mubr.bf16.mxu0 0
        %1182 = vmatmul.mubr.bf16.gmra.mxu0 %v1144
        %v1183 = vpop.f32.mrf.mxu0
        %v1184 = vadd.f32 0.0, %v1183
        %v1185 = vpop.f32.mrf.mxu0
        %v1186 = vpop.f32.mrf.mxu0
        %v1187 = vadd.f32 0.0, %v1186
        %v1188 = vpop.f32.mrf.mxu0
        %1189 = vdwg.mxu0
        %v1191 = vsel %vm766, %v677, 0
        %v1194 = vsel %vm766, %v709, 0
        %1196 = vmatprep.subr.bf16.mxu0 0
        %1197 = vmatpush1.bf16.xpose.msra.mxu0 0
        %1198 = vmatprep.subr.bf16.mxu0 0
        %1199 = vmatpush1.bf16.xpose.msra.mxu0 0
        %1200 = vmatprep.subr.bf16.mxu0 0
        %1201 = vmatpush1.bf16.xpose.msra.mxu0 0
        %1202 = vmatprep.subr.bf16.mxu0 0
        %1203 = vmatpush1.bf16.xpose.msra.mxu0 0
        %1204 = vmatprep.subr.bf16.mxu0 0
        %1205 = vmatpush1.bf16.xpose.msra.mxu0 0
        %1206 = vmatprep.subr.bf16.mxu0 0
        %1207 = vmatpush1.bf16.xpose.msra.mxu0 0
        %1208 = vmatprep.subr.bf16.mxu0 0
        %1209 = vmatpush1.bf16.xpose.msra.mxu0 0
        %1210 = vmatprep.subr.bf16.mxu0 0
        %1211 = vmatpush1.bf16.xpose.msra.mxu0 %v1194
        %1212 = vmatprep.subr.bf16.mxu0 0
        %1213 = vmatpush2.bf16.xpose.msra.mxu0 0
        %1214 = vmatprep.subr.bf16.mxu0 0
        %1215 = vmatpush2.bf16.xpose.msra.mxu0 0
        %1216 = vmatprep.subr.bf16.mxu0 0
        %1217 = vmatpush2.bf16.xpose.msra.mxu0 0
        %1218 = vmatprep.subr.bf16.mxu0 0
        %1219 = vmatpush2.bf16.xpose.msra.mxu0 0
        %1220 = vmatprep.subr.bf16.mxu0 0
        %1221 = vmatpush2.bf16.xpose.msra.mxu0 0
        %1222 = vmatprep.subr.bf16.mxu0 0
        %1223 = vmatpush2.bf16.xpose.msra.mxu0 0
        %1224 = vmatprep.subr.bf16.mxu0 0
        %1225 = vmatpush2.bf16.xpose.msra.mxu0 0
        %1226 = vmatprep.subr.bf16.mxu0 0
        %1227 = vmatpush2.bf16.xpose.msra.mxu0 0
        %1228 = vmatprep.mubr.bf16.mxu0 0
        %1229 = vmatmul.mubr.bf16.gmra.mxu0 %v1191
        %v1230 = vpop.f32.mrf.mxu0
        %v1231 = vadd.f32 0.0, %v1230
        %v1232 = vpop.f32.mrf.mxu0
        %v1233 = vpop.f32.mrf.mxu0
        %v1234 = vadd.f32 0.0, %v1233
        %v1235 = vpop.f32.mrf.mxu0
        %1236 = vdwg.mxu0
        %v1238 = vsel %vm766, %v679, 0
        %v1241 = vsel %vm766, %v711, 0
        %1243 = vmatprep.subr.bf16.mxu0 0
        %1244 = vmatpush1.bf16.xpose.msra.mxu0 0
        %1245 = vmatprep.subr.bf16.mxu0 0
        %1246 = vmatpush1.bf16.xpose.msra.mxu0 0
        %1247 = vmatprep.subr.bf16.mxu0 0
        %1248 = vmatpush1.bf16.xpose.msra.mxu0 0
        %1249 = vmatprep.subr.bf16.mxu0 0
        %1250 = vmatpush1.bf16.xpose.msra.mxu0 0
        %1251 = vmatprep.subr.bf16.mxu0 0
        %1252 = vmatpush1.bf16.xpose.msra.mxu0 0
        %1253 = vmatprep.subr.bf16.mxu0 0
        %1254 = vmatpush1.bf16.xpose.msra.mxu0 0
        %1255 = vmatprep.subr.bf16.mxu0 0
        %1256 = vmatpush1.bf16.xpose.msra.mxu0 0
        %1257 = vmatprep.subr.bf16.mxu0 0
        %1258 = vmatpush1.bf16.xpose.msra.mxu0 %v1241
        %1259 = vmatprep.subr.bf16.mxu0 0
        %1260 = vmatpush2.bf16.xpose.msra.mxu0 0
        %1261 = vmatprep.subr.bf16.mxu0 0
        %1262 = vmatpush2.bf16.xpose.msra.mxu0 0
        %1263 = vmatprep.subr.bf16.mxu0 0
        %1264 = vmatpush2.bf16.xpose.msra.mxu0 0
        %1265 = vmatprep.subr.bf16.mxu0 0
        %1266 = vmatpush2.bf16.xpose.msra.mxu0 0
        %1267 = vmatprep.subr.bf16.mxu0 0
        %1268 = vmatpush2.bf16.xpose.msra.mxu0 0
        %1269 = vmatprep.subr.bf16.mxu0 0
        %1270 = vmatpush2.bf16.xpose.msra.mxu0 0
        %1271 = vmatprep.subr.bf16.mxu0 0
        %1272 = vmatpush2.bf16.xpose.msra.mxu0 0
        %1273 = vmatprep.subr.bf16.mxu0 0
        %1274 = vmatpush2.bf16.xpose.msra.mxu0 0
        %1275 = vmatprep.mubr.bf16.mxu0 0
        %1276 = vmatmul.mubr.bf16.gmra.mxu0 %v1238
        %v1277 = vpop.f32.mrf.mxu0
        %v1278 = vadd.f32 0.0, %v1277
        %v1279 = vpop.f32.mrf.mxu0
        %v1280 = vpop.f32.mrf.mxu0
        %v1281 = vadd.f32 0.0, %v1280
        %v1282 = vpop.f32.mrf.mxu0
        %1283 = vdwg.mxu0
        %v1285 = vsel %vm766, %v681, 0
        %v1288 = vsel %vm766, %v713, 0
        %1290 = vmatprep.subr.bf16.mxu0 0
        %1291 = vmatpush1.bf16.xpose.msra.mxu0 0
        %1292 = vmatprep.subr.bf16.mxu0 0
        %1293 = vmatpush1.bf16.xpose.msra.mxu0 0
        %1294 = vmatprep.subr.bf16.mxu0 0
        %1295 = vmatpush1.bf16.xpose.msra.mxu0 0
        %1296 = vmatprep.subr.bf16.mxu0 0
        %1297 = vmatpush1.bf16.xpose.msra.mxu0 0
        %1298 = vmatprep.subr.bf16.mxu0 0
        %1299 = vmatpush1.bf16.xpose.msra.mxu0 0
        %1300 = vmatprep.subr.bf16.mxu0 0
        %1301 = vmatpush1.bf16.xpose.msra.mxu0 0
        %1302 = vmatprep.subr.bf16.mxu0 0
        %1303 = vmatpush1.bf16.xpose.msra.mxu0 0
        %1304 = vmatprep.subr.bf16.mxu0 0
        %1305 = vmatpush1.bf16.xpose.msra.mxu0 %v1288
        %1306 = vmatprep.subr.bf16.mxu0 0
        %1307 = vmatpush2.bf16.xpose.msra.mxu0 0
        %1308 = vmatprep.subr.bf16.mxu0 0
        %1309 = vmatpush2.bf16.xpose.msra.mxu0 0
        %1310 = vmatprep.subr.bf16.mxu0 0
        %1311 = vmatpush2.bf16.xpose.msra.mxu0 0
        %1312 = vmatprep.subr.bf16.mxu0 0
        %1313 = vmatpush2.bf16.xpose.msra.mxu0 0
        %1314 = vmatprep.subr.bf16.mxu0 0
        %1315 = vmatpush2.bf16.xpose.msra.mxu0 0
        %1316 = vmatprep.subr.bf16.mxu0 0
        %1317 = vmatpush2.bf16.xpose.msra.mxu0 0
        %1318 = vmatprep.subr.bf16.mxu0 0
        %1319 = vmatpush2.bf16.xpose.msra.mxu0 0
        %1320 = vmatprep.subr.bf16.mxu0 0
        %1321 = vmatpush2.bf16.xpose.msra.mxu0 0
        %1322 = vmatprep.mubr.bf16.mxu0 0
        %1323 = vmatmul.mubr.bf16.gmra.mxu0 %v1285
        %v1324 = vpop.f32.mrf.mxu0
        %v1325 = vadd.f32 0.0, %v1324
        %v1326 = vpop.f32.mrf.mxu0
        %v1327 = vpop.f32.mrf.mxu0
        %v1328 = vadd.f32 0.0, %v1327
        %v1329 = vpop.f32.mrf.mxu0
        %1330 = vdwg.mxu0
        %v1332 = vsel %vm766, %v683, 0
        %v1335 = vsel %vm766, %v715, 0
        %1337 = vmatprep.subr.bf16.mxu0 0
        %1338 = vmatpush1.bf16.xpose.msra.mxu0 0
        %1339 = vmatprep.subr.bf16.mxu0 0
        %1340 = vmatpush1.bf16.xpose.msra.mxu0 0
        %1341 = vmatprep.subr.bf16.mxu0 0
        %1342 = vmatpush1.bf16.xpose.msra.mxu0 0
        %1343 = vmatprep.subr.bf16.mxu0 0
        %1344 = vmatpush1.bf16.xpose.msra.mxu0 0
        %1345 = vmatprep.subr.bf16.mxu0 0
        %1346 = vmatpush1.bf16.xpose.msra.mxu0 0
        %1347 = vmatprep.subr.bf16.mxu0 0
        %1348 = vmatpush1.bf16.xpose.msra.mxu0 0
        %1349 = vmatprep.subr.bf16.mxu0 0
        %1350 = vmatpush1.bf16.xpose.msra.mxu0 0
        %1351 = vmatprep.subr.bf16.mxu0 0
        %1352 = vmatpush1.bf16.xpose.msra.mxu0 %v1335
        %1353 = vmatprep.subr.bf16.mxu0 0
        %1354 = vmatpush2.bf16.xpose.msra.mxu0 0
        %1355 = vmatprep.subr.bf16.mxu0 0
        %1356 = vmatpush2.bf16.xpose.msra.mxu0 0
        %1357 = vmatprep.subr.bf16.mxu0 0
        %1358 = vmatpush2.bf16.xpose.msra.mxu0 0
        %1359 = vmatprep.subr.bf16.mxu0 0
        %1360 = vmatpush2.bf16.xpose.msra.mxu0 0
        %1361 = vmatprep.subr.bf16.mxu0 0
        %1362 = vmatpush2.bf16.xpose.msra.mxu0 0
        %1363 = vmatprep.subr.bf16.mxu0 0
        %1364 = vmatpush2.bf16.xpose.msra.mxu0 0
        %1365 = vmatprep.subr.bf16.mxu0 0
        %1366 = vmatpush2.bf16.xpose.msra.mxu0 0
        %1367 = vmatprep.subr.bf16.mxu0 0
        %1368 = vmatpush2.bf16.xpose.msra.mxu0 0
        %1369 = vmatprep.mubr.bf16.mxu0 0
        %1370 = vmatmul.mubr.bf16.gmra.mxu0 %v1332
        %v1371 = vpop.f32.mrf.mxu0
        %v1372 = vadd.f32 0.0, %v1371
        %v1373 = vpop.f32.mrf.mxu0
        %v1374 = vpop.f32.mrf.mxu0
        %v1375 = vadd.f32 0.0, %v1374
        %v1376 = vpop.f32.mrf.mxu0
        %1377 = vdwg.mxu0
        %v1379 = vsel %vm766, %v685, 0
        %v1382 = vsel %vm766, %v717, 0
        %1384 = vmatprep.subr.bf16.mxu0 0
        %1385 = vmatpush1.bf16.xpose.msra.mxu0 0
        %1386 = vmatprep.subr.bf16.mxu0 0
        %1387 = vmatpush1.bf16.xpose.msra.mxu0 0
        %1388 = vmatprep.subr.bf16.mxu0 0
        %1389 = vmatpush1.bf16.xpose.msra.mxu0 0
        %1390 = vmatprep.subr.bf16.mxu0 0
        %1391 = vmatpush1.bf16.xpose.msra.mxu0 0
        %1392 = vmatprep.subr.bf16.mxu0 0
        %1393 = vmatpush1.bf16.xpose.msra.mxu0 0
        %1394 = vmatprep.subr.bf16.mxu0 0
        %1395 = vmatpush1.bf16.xpose.msra.mxu0 0
        %1396 = vmatprep.subr.bf16.mxu0 0
        %1397 = vmatpush1.bf16.xpose.msra.mxu0 0
        %1398 = vmatprep.subr.bf16.mxu0 0
        %1399 = vmatpush1.bf16.xpose.msra.mxu0 %v1382
        %1400 = vmatprep.subr.bf16.mxu0 0
        %1401 = vmatpush2.bf16.xpose.msra.mxu0 0
        %1402 = vmatprep.subr.bf16.mxu0 0
        %1403 = vmatpush2.bf16.xpose.msra.mxu0 0
        %1404 = vmatprep.subr.bf16.mxu0 0
        %1405 = vmatpush2.bf16.xpose.msra.mxu0 0
        %1406 = vmatprep.subr.bf16.mxu0 0
        %1407 = vmatpush2.bf16.xpose.msra.mxu0 0
        %1408 = vmatprep.subr.bf16.mxu0 0
        %1409 = vmatpush2.bf16.xpose.msra.mxu0 0
        %1410 = vmatprep.subr.bf16.mxu0 0
        %1411 = vmatpush2.bf16.xpose.msra.mxu0 0
        %1412 = vmatprep.subr.bf16.mxu0 0
        %1413 = vmatpush2.bf16.xpose.msra.mxu0 0
        %1414 = vmatprep.subr.bf16.mxu0 0
        %1415 = vmatpush2.bf16.xpose.msra.mxu0 0
        %1416 = vmatprep.mubr.bf16.mxu0 0
        %1417 = vmatmul.mubr.bf16.gmra.mxu0 %v1379
        %v1418 = vpop.f32.mrf.mxu0
        %v1419 = vadd.f32 0.0, %v1418
        %v1420 = vpop.f32.mrf.mxu0
        %v1421 = vpop.f32.mrf.mxu0
        %v1422 = vadd.f32 0.0, %v1421
        %v1423 = vpop.f32.mrf.mxu0
        %1424 = vdwg.mxu0
        %v1426 = vsel %vm766, %v687, 0
        %v1429 = vsel %vm766, %v719, 0
        %1431 = vmatprep.subr.bf16.mxu0 0
        %1432 = vmatpush1.bf16.xpose.msra.mxu0 0
        %1433 = vmatprep.subr.bf16.mxu0 0
        %1434 = vmatpush1.bf16.xpose.msra.mxu0 0
        %1435 = vmatprep.subr.bf16.mxu0 0
        %1436 = vmatpush1.bf16.xpose.msra.mxu0 0
        %1437 = vmatprep.subr.bf16.mxu0 0
        %1438 = vmatpush1.bf16.xpose.msra.mxu0 0
        %1439 = vmatprep.subr.bf16.mxu0 0
        %1440 = vmatpush1.bf16.xpose.msra.mxu0 0
        %1441 = vmatprep.subr.bf16.mxu0 0
        %1442 = vmatpush1.bf16.xpose.msra.mxu0 0
        %1443 = vmatprep.subr.bf16.mxu0 0
        %1444 = vmatpush1.bf16.xpose.msra.mxu0 0
        %1445 = vmatprep.subr.bf16.mxu0 0
        %1446 = vmatpush1.bf16.xpose.msra.mxu0 %v1429
        %1447 = vmatprep.subr.bf16.mxu0 0
        %1448 = vmatpush2.bf16.xpose.msra.mxu0 0
        %1449 = vmatprep.subr.bf16.mxu0 0
        %1450 = vmatpush2.bf16.xpose.msra.mxu0 0
        %1451 = vmatprep.subr.bf16.mxu0 0
        %1452 = vmatpush2.bf16.xpose.msra.mxu0 0
        %1453 = vmatprep.subr.bf16.mxu0 0
        %1454 = vmatpush2.bf16.xpose.msra.mxu0 0
        %1455 = vmatprep.subr.bf16.mxu0 0
        %1456 = vmatpush2.bf16.xpose.msra.mxu0 0
        %1457 = vmatprep.subr.bf16.mxu0 0
        %1458 = vmatpush2.bf16.xpose.msra.mxu0 0
        %1459 = vmatprep.subr.bf16.mxu0 0
        %1460 = vmatpush2.bf16.xpose.msra.mxu0 0
        %1461 = vmatprep.subr.bf16.mxu0 0
        %1462 = vmatpush2.bf16.xpose.msra.mxu0 0
        %1463 = vmatprep.mubr.bf16.mxu0 0
        %1464 = vmatmul.mubr.bf16.gmra.mxu0 %v1426
        %v1465 = vpop.f32.mrf.mxu0
        %v1466 = vadd.f32 0.0, %v1465
        %v1467 = vpop.f32.mrf.mxu0
        %v1468 = vpop.f32.mrf.mxu0
        %v1469 = vadd.f32 0.0, %v1468
        %v1470 = vpop.f32.mrf.mxu0
        %1471 = vdwg.mxu0
        %v1473 = vsel %vm766, %v689, 0
        %v1476 = vsel %vm766, %v721, 0
        %1478 = vmatprep.subr.bf16.mxu0 0
        %1479 = vmatpush1.bf16.xpose.msra.mxu0 0
        %1480 = vmatprep.subr.bf16.mxu0 0
        %1481 = vmatpush1.bf16.xpose.msra.mxu0 0
        %1482 = vmatprep.subr.bf16.mxu0 0
        %1483 = vmatpush1.bf16.xpose.msra.mxu0 0
        %1484 = vmatprep.subr.bf16.mxu0 0
        %1485 = vmatpush1.bf16.xpose.msra.mxu0 0
        %1486 = vmatprep.subr.bf16.mxu0 0
        %1487 = vmatpush1.bf16.xpose.msra.mxu0 0
        %1488 = vmatprep.subr.bf16.mxu0 0
        %1489 = vmatpush1.bf16.xpose.msra.mxu0 0
        %1490 = vmatprep.subr.bf16.mxu0 0
        %1491 = vmatpush1.bf16.xpose.msra.mxu0 0
        %1492 = vmatprep.subr.bf16.mxu0 0
        %1493 = vmatpush1.bf16.xpose.msra.mxu0 %v1476
        %1494 = vmatprep.subr.bf16.mxu0 0
        %1495 = vmatpush2.bf16.xpose.msra.mxu0 0
        %1496 = vmatprep.subr.bf16.mxu0 0
        %1497 = vmatpush2.bf16.xpose.msra.mxu0 0
        %1498 = vmatprep.subr.bf16.mxu0 0
        %1499 = vmatpush2.bf16.xpose.msra.mxu0 0
        %1500 = vmatprep.subr.bf16.mxu0 0
        %1501 = vmatpush2.bf16.xpose.msra.mxu0 0
        %1502 = vmatprep.subr.bf16.mxu0 0
        %1503 = vmatpush2.bf16.xpose.msra.mxu0 0
        %1504 = vmatprep.subr.bf16.mxu0 0
        %1505 = vmatpush2.bf16.xpose.msra.mxu0 0
        %1506 = vmatprep.subr.bf16.mxu0 0
        %1507 = vmatpush2.bf16.xpose.msra.mxu0 0
        %1508 = vmatprep.subr.bf16.mxu0 0
        %1509 = vmatpush2.bf16.xpose.msra.mxu0 0
        %1510 = vmatprep.mubr.bf16.mxu0 0
        %1511 = vmatmul.mubr.bf16.gmra.mxu0 %v1473
        %v1512 = vpop.f32.mrf.mxu0
        %v1513 = vadd.f32 0.0, %v1512
        %v1514 = vpop.f32.mrf.mxu0
        %v1515 = vpop.f32.mrf.mxu0
        %v1516 = vadd.f32 0.0, %v1515
        %v1517 = vpop.f32.mrf.mxu0
        %1518 = vdwg.mxu0
        %v1519 = vld [vmem:[#allocation11] sm:$0xff]
        %v1520 = vld [vmem:[#allocation11 + $0x8] sm:$0xff]
        %v1521 = vld [vmem:[#allocation11 + $0x10] sm:$0xff]
        %v1522 = vld [vmem:[#allocation11 + $0x18] sm:$0xff]
        %v1523 = vld [vmem:[#allocation11 + $0x20] sm:$0xff]
        %v1524 = vld [vmem:[#allocation11 + $0x28] sm:$0xff]
        %v1525 = vld [vmem:[#allocation11 + $0x30] sm:$0xff]
        %v1526 = vld [vmem:[#allocation11 + $0x38] sm:$0xff]
        %v1527 = vadd.f32 %v808, %v1519
        %v1528 = vadd.f32 %v811, %v1520
        %v1529 = vadd.f32 %v855, %v1519
        %v1530 = vadd.f32 %v858, %v1520
        %v1531 = vadd.f32 %v902, %v1519
        %v1532 = vadd.f32 %v905, %v1520
        %v1533 = vadd.f32 %v949, %v1519
        %v1534 = vadd.f32 %v952, %v1520
        %v1535 = vadd.f32 %v996, %v1521
        %v1536 = vadd.f32 %v999, %v1522
        %v1537 = vadd.f32 %v1043, %v1521
        %v1538 = vadd.f32 %v1046, %v1522
        %v1539 = vadd.f32 %v1090, %v1521
        %v1540 = vadd.f32 %v1093, %v1522
        %v1541 = vadd.f32 %v1137, %v1521
        %v1542 = vadd.f32 %v1140, %v1522
        %v1543 = vadd.f32 %v1184, %v1523
        %v1544 = vadd.f32 %v1187, %v1524
        %v1545 = vadd.f32 %v1231, %v1523
        %v1546 = vadd.f32 %v1234, %v1524
        %v1547 = vadd.f32 %v1278, %v1523
        %v1548 = vadd.f32 %v1281, %v1524
        %v1549 = vadd.f32 %v1325, %v1523
        %v1550 = vadd.f32 %v1328, %v1524
        %v1551 = vadd.f32 %v1372, %v1525
        %v1552 = vadd.f32 %v1375, %v1526
        %v1553 = vadd.f32 %v1419, %v1525
        %v1554 = vadd.f32 %v1422, %v1526
        %v1555 = vadd.f32 %v1466, %v1525
        %v1556 = vadd.f32 %v1469, %v1526
        %v1557 = vadd.f32 %v1513, %v1525
        %v1558 = vadd.f32 %v1516, %v1526
        %vm1559 = vcmask 130048
        %v1560 = vsel %vm1559, %v1527, -inf
        %1561 = vmax.xlane.f32.xlu0 %v1560
        %v1562 = vpop.xlane.xlu0 %1561
        %v1563 = vsel %vm1559, %v1528, -inf
        %1564 = vmax.xlane.f32.xlu0 %v1563
        %v1565 = vpop.xlane.xlu0 %1564
        %v1566 = vsel %vm1559, %v1529, -inf
        %1567 = vmax.xlane.f32.xlu0 %v1566
        %v1568 = vpop.xlane.xlu0 %1567
        %v1569 = vsel %vm1559, %v1530, -inf
        %1570 = vmax.xlane.f32.xlu0 %v1569
        %v1571 = vpop.xlane.xlu0 %1570
        %v1572 = vsel %vm1559, %v1531, -inf
        %1573 = vmax.xlane.f32.xlu0 %v1572
        %v1574 = vpop.xlane.xlu0 %1573
        %v1575 = vsel %vm1559, %v1532, -inf
        %1576 = vmax.xlane.f32.xlu0 %v1575
        %v1577 = vpop.xlane.xlu0 %1576
        %v1578 = vsel %vm1559, %v1533, -inf
        %1579 = vmax.xlane.f32.xlu0 %v1578
        %v1580 = vpop.xlane.xlu0 %1579
        %v1581 = vsel %vm1559, %v1534, -inf
        %1582 = vmax.xlane.f32.xlu0 %v1581
        %v1583 = vpop.xlane.xlu0 %1582
        %v1584 = vsel %vm1559, %v1535, -inf
        %1585 = vmax.xlane.f32.xlu0 %v1584
        %v1586 = vpop.xlane.xlu0 %1585
        %v1587 = vsel %vm1559, %v1536, -inf
        %1588 = vmax.xlane.f32.xlu0 %v1587
        %v1589 = vpop.xlane.xlu0 %1588
        %v1590 = vsel %vm1559, %v1537, -inf
        %1591 = vmax.xlane.f32.xlu0 %v1590
        %v1592 = vpop.xlane.xlu0 %1591
        %v1593 = vsel %vm1559, %v1538, -inf
        %1594 = vmax.xlane.f32.xlu0 %v1593
        %v1595 = vpop.xlane.xlu0 %1594
        %v1596 = vsel %vm1559, %v1539, -inf
        %1597 = vmax.xlane.f32.xlu0 %v1596
        %v1598 = vpop.xlane.xlu0 %1597
        %v1599 = vsel %vm1559, %v1540, -inf
        %1600 = vmax.xlane.f32.xlu0 %v1599
        %v1601 = vpop.xlane.xlu0 %1600
        %v1602 = vsel %vm1559, %v1541, -inf
        %1603 = vmax.xlane.f32.xlu0 %v1602
        %v1604 = vpop.xlane.xlu0 %1603
        %v1605 = vsel %vm1559, %v1542, -inf
        %1606 = vmax.xlane.f32.xlu0 %v1605
        %v1607 = vpop.xlane.xlu0 %1606
        %v1608 = vsel %vm1559, %v1543, -inf
        %1609 = vmax.xlane.f32.xlu0 %v1608
        %v1610 = vpop.xlane.xlu0 %1609
        %v1611 = vsel %vm1559, %v1544, -inf
        %1612 = vmax.xlane.f32.xlu0 %v1611
        %v1613 = vpop.xlane.xlu0 %1612
        %v1614 = vsel %vm1559, %v1545, -inf
        %1615 = vmax.xlane.f32.xlu0 %v1614
        %v1616 = vpop.xlane.xlu0 %1615
        %v1617 = vsel %vm1559, %v1546, -inf
        %1618 = vmax.xlane.f32.xlu0 %v1617
        %v1619 = vpop.xlane.xlu0 %1618
        %v1620 = vsel %vm1559, %v1547, -inf
        %1621 = vmax.xlane.f32.xlu0 %v1620
        %v1622 = vpop.xlane.xlu0 %1621
        %v1623 = vsel %vm1559, %v1548, -inf
        %1624 = vmax.xlane.f32.xlu0 %v1623
        %v1625 = vpop.xlane.xlu0 %1624
        %v1626 = vsel %vm1559, %v1549, -inf
        %1627 = vmax.xlane.f32.xlu0 %v1626
        %v1628 = vpop.xlane.xlu0 %1627
        %v1629 = vsel %vm1559, %v1550, -inf
        %1630 = vmax.xlane.f32.xlu0 %v1629
        %v1631 = vpop.xlane.xlu0 %1630
        %v1632 = vsel %vm1559, %v1551, -inf
        %1633 = vmax.xlane.f32.xlu0 %v1632
        %v1634 = vpop.xlane.xlu0 %1633
        %v1635 = vsel %vm1559, %v1552, -inf
        %1636 = vmax.xlane.f32.xlu0 %v1635
        %v1637 = vpop.xlane.xlu0 %1636
        %v1638 = vsel %vm1559, %v1553, -inf
        %1639 = vmax.xlane.f32.xlu0 %v1638
        %v1640 = vpop.xlane.xlu0 %1639
        %v1641 = vsel %vm1559, %v1554, -inf
        %1642 = vmax.xlane.f32.xlu0 %v1641
        %v1643 = vpop.xlane.xlu0 %1642
        %v1644 = vsel %vm1559, %v1555, -inf
        %1645 = vmax.xlane.f32.xlu0 %v1644
        %v1646 = vpop.xlane.xlu0 %1645
        %v1647 = vsel %vm1559, %v1556, -inf
        %1648 = vmax.xlane.f32.xlu0 %v1647
        %v1649 = vpop.xlane.xlu0 %1648
        %v1650 = vsel %vm1559, %v1557, -inf
        %1651 = vmax.xlane.f32.xlu0 %v1650
        %v1652 = vpop.xlane.xlu0 %1651
        %v1653 = vsel %vm1559, %v1558, -inf
        %1654 = vmax.xlane.f32.xlu0 %v1653
        %v1655 = vpop.xlane.xlu0 %1654
        %v1656 = vsub.f32 %v1527, %v1562
        %v1657 = vsub.f32 %v1528, %v1565
        %v1658 = vsub.f32 %v1529, %v1568
        %v1659 = vsub.f32 %v1530, %v1571
        %v1660 = vsub.f32 %v1531, %v1574
        %v1661 = vsub.f32 %v1532, %v1577
        %v1662 = vsub.f32 %v1533, %v1580
        %v1663 = vsub.f32 %v1534, %v1583
        %v1664 = vsub.f32 %v1535, %v1586
        %v1665 = vsub.f32 %v1536, %v1589
        %v1666 = vsub.f32 %v1537, %v1592
        %v1667 = vsub.f32 %v1538, %v1595
        %v1668 = vsub.f32 %v1539, %v1598
        %v1669 = vsub.f32 %v1540, %v1601
        %v1670 = vsub.f32 %v1541, %v1604
        %v1671 = vsub.f32 %v1542, %v1607
        %v1672 = vsub.f32 %v1543, %v1610
        %v1673 = vsub.f32 %v1544, %v1613
        %v1674 = vsub.f32 %v1545, %v1616
        %v1675 = vsub.f32 %v1546, %v1619
        %v1676 = vsub.f32 %v1547, %v1622
        %v1677 = vsub.f32 %v1548, %v1625
        %v1678 = vsub.f32 %v1549, %v1628
        %v1679 = vsub.f32 %v1550, %v1631
        %v1680 = vsub.f32 %v1551, %v1634
        %v1681 = vsub.f32 %v1552, %v1637
        %v1682 = vsub.f32 %v1553, %v1640
        %v1683 = vsub.f32 %v1554, %v1643
        %v1684 = vsub.f32 %v1555, %v1646
        %v1685 = vsub.f32 %v1556, %v1649
        %v1686 = vsub.f32 %v1557, %v1652
        %v1687 = vsub.f32 %v1558, %v1655
        %v1688 = vmul.f32 %v1656, 1.442695
        %v1689 = vpow.pop %v1688
        %v1690 = vmul.f32 %v1657, 1.442695
        %v1691 = vpow.pop %v1690
        %v1692 = vmul.f32 %v1658, 1.442695
        %v1693 = vpow.pop %v1692
        %v1694 = vmul.f32 %v1659, 1.442695
        %v1695 = vpow.pop %v1694
        %v1696 = vmul.f32 %v1660, 1.442695
        %v1697 = vpow.pop %v1696
        %v1698 = vmul.f32 %v1661, 1.442695
        %v1699 = vpow.pop %v1698
        %v1700 = vmul.f32 %v1662, 1.442695
        %v1701 = vpow.pop %v1700
        %v1702 = vmul.f32 %v1663, 1.442695
        %v1703 = vpow.pop %v1702
        %v1704 = vmul.f32 %v1664, 1.442695
        %v1705 = vpow.pop %v1704
        %v1706 = vmul.f32 %v1665, 1.442695
        %v1707 = vpow.pop %v1706
        %v1708 = vmul.f32 %v1666, 1.442695
        %v1709 = vpow.pop %v1708
        %v1710 = vmul.f32 %v1667, 1.442695
        %v1711 = vpow.pop %v1710
        %v1712 = vmul.f32 %v1668, 1.442695
        %v1713 = vpow.pop %v1712
        %v1714 = vmul.f32 %v1669, 1.442695
        %v1715 = vpow.pop %v1714
        %v1716 = vmul.f32 %v1670, 1.442695
        %v1717 = vpow.pop %v1716
        %v1718 = vmul.f32 %v1671, 1.442695
        %v1719 = vpow.pop %v1718
        %v1720 = vmul.f32 %v1672, 1.442695
        %v1721 = vpow.pop %v1720
        %v1722 = vmul.f32 %v1673, 1.442695
        %v1723 = vpow.pop %v1722
        %v1724 = vmul.f32 %v1674, 1.442695
        %v1725 = vpow.pop %v1724
        %v1726 = vmul.f32 %v1675, 1.442695
        %v1727 = vpow.pop %v1726
        %v1728 = vmul.f32 %v1676, 1.442695
        %v1729 = vpow.pop %v1728
        %v1730 = vmul.f32 %v1677, 1.442695
        %v1731 = vpow.pop %v1730
        %v1732 = vmul.f32 %v1678, 1.442695
        %v1733 = vpow.pop %v1732
        %v1734 = vmul.f32 %v1679, 1.442695
        %v1735 = vpow.pop %v1734
        %v1736 = vmul.f32 %v1680, 1.442695
        %v1737 = vpow.pop %v1736
        %v1738 = vmul.f32 %v1681, 1.442695
        %v1739 = vpow.pop %v1738
        %v1740 = vmul.f32 %v1682, 1.442695
        %v1741 = vpow.pop %v1740
        %v1742 = vmul.f32 %v1683, 1.442695
        %v1743 = vpow.pop %v1742
        %v1744 = vmul.f32 %v1684, 1.442695
        %v1745 = vpow.pop %v1744
        %v1746 = vmul.f32 %v1685, 1.442695
        %v1747 = vpow.pop %v1746
        %v1748 = vmul.f32 %v1686, 1.442695
        %v1749 = vpow.pop %v1748
        %v1750 = vmul.f32 %v1687, 1.442695
        %v1751 = vpow.pop %v1750
        %v1752 = vsel %vm1559, %v1689, 0.0
        %1753 = vadd.xlane.f32.xlu0 %v1752
        %v1754 = vpop.xlane.xlu0 %1753
        %v1755 = vsel %vm1559, %v1691, 0.0
        %1756 = vadd.xlane.f32.xlu0 %v1755
        %v1757 = vpop.xlane.xlu0 %1756
        %v1758 = vsel %vm1559, %v1693, 0.0
        %1759 = vadd.xlane.f32.xlu0 %v1758
        %v1760 = vpop.xlane.xlu0 %1759
        %v1761 = vsel %vm1559, %v1695, 0.0
        %1762 = vadd.xlane.f32.xlu0 %v1761
        %v1763 = vpop.xlane.xlu0 %1762
        %v1764 = vsel %vm1559, %v1697, 0.0
        %1765 = vadd.xlane.f32.xlu0 %v1764
        %v1766 = vpop.xlane.xlu0 %1765
        %v1767 = vsel %vm1559, %v1699, 0.0
        %1768 = vadd.xlane.f32.xlu0 %v1767
        %v1769 = vpop.xlane.xlu0 %1768
        %v1770 = vsel %vm1559, %v1701, 0.0
        %1771 = vadd.xlane.f32.xlu0 %v1770
        %v1772 = vpop.xlane.xlu0 %1771
        %v1773 = vsel %vm1559, %v1703, 0.0
        %1774 = vadd.xlane.f32.xlu0 %v1773
        %v1775 = vpop.xlane.xlu0 %1774
        %v1776 = vsel %vm1559, %v1705, 0.0
        %1777 = vadd.xlane.f32.xlu0 %v1776
        %v1778 = vpop.xlane.xlu0 %1777
        %v1779 = vsel %vm1559, %v1707, 0.0
        %1780 = vadd.xlane.f32.xlu0 %v1779
        %v1781 = vpop.xlane.xlu0 %1780
        %v1782 = vsel %vm1559, %v1709, 0.0
        %1783 = vadd.xlane.f32.xlu0 %v1782
        %v1784 = vpop.xlane.xlu0 %1783
        %v1785 = vsel %vm1559, %v1711, 0.0
        %1786 = vadd.xlane.f32.xlu0 %v1785
        %v1787 = vpop.xlane.xlu0 %1786
        %v1788 = vsel %vm1559, %v1713, 0.0
        %1789 = vadd.xlane.f32.xlu0 %v1788
        %v1790 = vpop.xlane.xlu0 %1789
        %v1791 = vsel %vm1559, %v1715, 0.0
        %1792 = vadd.xlane.f32.xlu0 %v1791
        %v1793 = vpop.xlane.xlu0 %1792
        %v1794 = vsel %vm1559, %v1717, 0.0
        %1795 = vadd.xlane.f32.xlu0 %v1794
        %v1796 = vpop.xlane.xlu0 %1795
        %v1797 = vsel %vm1559, %v1719, 0.0
        %1798 = vadd.xlane.f32.xlu0 %v1797
        %v1799 = vpop.xlane.xlu0 %1798
        %v1800 = vsel %vm1559, %v1721, 0.0
        %1801 = vadd.xlane.f32.xlu0 %v1800
        %v1802 = vpop.xlane.xlu0 %1801
        %v1803 = vsel %vm1559, %v1723, 0.0
        %1804 = vadd.xlane.f32.xlu0 %v1803
        %v1805 = vpop.xlane.xlu0 %1804
        %v1806 = vsel %vm1559, %v1725, 0.0
        %1807 = vadd.xlane.f32.xlu0 %v1806
        %v1808 = vpop.xlane.xlu0 %1807
        %v1809 = vsel %vm1559, %v1727, 0.0
        %1810 = vadd.xlane.f32.xlu0 %v1809
        %v1811 = vpop.xlane.xlu0 %1810
        %v1812 = vsel %vm1559, %v1729, 0.0
        %1813 = vadd.xlane.f32.xlu0 %v1812
        %v1814 = vpop.xlane.xlu0 %1813
        %v1815 = vsel %vm1559, %v1731, 0.0
        %1816 = vadd.xlane.f32.xlu0 %v1815
        %v1817 = vpop.xlane.xlu0 %1816
        %v1818 = vsel %vm1559, %v1733, 0.0
        %1819 = vadd.xlane.f32.xlu0 %v1818
        %v1820 = vpop.xlane.xlu0 %1819
        %v1821 = vsel %vm1559, %v1735, 0.0
        %1822 = vadd.xlane.f32.xlu0 %v1821
        %v1823 = vpop.xlane.xlu0 %1822
        %v1824 = vsel %vm1559, %v1737, 0.0
        %1825 = vadd.xlane.f32.xlu0 %v1824
        %v1826 = vpop.xlane.xlu0 %1825
        %v1827 = vsel %vm1559, %v1739, 0.0
        %1828 = vadd.xlane.f32.xlu0 %v1827
        %v1829 = vpop.xlane.xlu0 %1828
        %v1830 = vsel %vm1559, %v1741, 0.0
        %1831 = vadd.xlane.f32.xlu0 %v1830
        %v1832 = vpop.xlane.xlu0 %1831
        %v1833 = vsel %vm1559, %v1743, 0.0
        %1834 = vadd.xlane.f32.xlu0 %v1833
        %v1835 = vpop.xlane.xlu0 %1834
        %v1836 = vsel %vm1559, %v1745, 0.0
        %1837 = vadd.xlane.f32.xlu0 %v1836
        %v1838 = vpop.xlane.xlu0 %1837
        %v1839 = vsel %vm1559, %v1747, 0.0
        %1840 = vadd.xlane.f32.xlu0 %v1839
        %v1841 = vpop.xlane.xlu0 %1840
        %v1842 = vsel %vm1559, %v1749, 0.0
        %1843 = vadd.xlane.f32.xlu0 %v1842
        %v1844 = vpop.xlane.xlu0 %1843
        %v1845 = vsel %vm1559, %v1751, 0.0
        %1846 = vadd.xlane.f32.xlu0 %v1845
        %v1847 = vpop.xlane.xlu0 %1846
        %v1848 = vpack.c.bf16 %v1691, %v1689
        %v1849 = vpack.c.bf16 %v1695, %v1693
        %v1850 = vpack.c.bf16 %v1699, %v1697
        %v1851 = vpack.c.bf16 %v1703, %v1701
        %v1852 = vpack.c.bf16 %v1707, %v1705
        %v1853 = vpack.c.bf16 %v1711, %v1709
        %v1854 = vpack.c.bf16 %v1715, %v1713
        %v1855 = vpack.c.bf16 %v1719, %v1717
        %v1856 = vpack.c.bf16 %v1723, %v1721
        %v1857 = vpack.c.bf16 %v1727, %v1725
        %v1858 = vpack.c.bf16 %v1731, %v1729
        %v1859 = vpack.c.bf16 %v1735, %v1733
        %v1860 = vpack.c.bf16 %v1739, %v1737
        %v1861 = vpack.c.bf16 %v1743, %v1741
        %v1862 = vpack.c.bf16 %v1747, %v1745
        %v1863 = vpack.c.bf16 %v1751, %v1749
        %v1865 = vsel %vm1559, %v1848, 0
        %1867 = vmatprep.subr.bf16.mxu0 0
        %1868 = vmatpush1.bf16.msra.mxu0 0
        %1869 = vmatprep.subr.bf16.mxu0 0
        %1870 = vmatpush1.bf16.msra.mxu0 0
        %1871 = vmatprep.subr.bf16.mxu0 0
        %1872 = vmatpush1.bf16.msra.mxu0 0
        %1873 = vmatprep.subr.bf16.mxu0 0
        %1874 = vmatpush1.bf16.msra.mxu0 0
        %1875 = vmatprep.subr.bf16.mxu0 0
        %1876 = vmatpush1.bf16.msra.mxu0 0
        %1877 = vmatprep.subr.bf16.mxu0 0
        %1878 = vmatpush1.bf16.msra.mxu0 0
        %1879 = vmatprep.subr.bf16.mxu0 0
        %1880 = vmatpush1.bf16.msra.mxu0 0
        %1881 = vmatprep.subr.bf16.mxu0 0
        %1882 = vmatpush1.bf16.msra.mxu0 %v722
        %1883 = vmatprep.subr.bf16.mxu0 0
        %1884 = vmatpush2.bf16.msra.mxu0 0
        %1885 = vmatprep.subr.bf16.mxu0 0
        %1886 = vmatpush2.bf16.msra.mxu0 0
        %1887 = vmatprep.subr.bf16.mxu0 0
        %1888 = vmatpush2.bf16.msra.mxu0 0
        %1889 = vmatprep.subr.bf16.mxu0 0
        %1890 = vmatpush2.bf16.msra.mxu0 0
        %1891 = vmatprep.subr.bf16.mxu0 0
        %1892 = vmatpush2.bf16.msra.mxu0 0
        %1893 = vmatprep.subr.bf16.mxu0 0
        %1894 = vmatpush2.bf16.msra.mxu0 0
        %1895 = vmatprep.subr.bf16.mxu0 0
        %1896 = vmatpush2.bf16.msra.mxu0 0
        %1897 = vmatprep.subr.bf16.mxu0 0
        %1898 = vmatpush2.bf16.msra.mxu0 0
        %1899 = vmatprep.mubr.bf16.mxu0 0
        %1900 = vmatmul.mubr.bf16.gmra.mxu0 %v1865
        %v1901 = vpop.f32.mrf.mxu0
        %v1902 = vadd.f32 0.0, %v1901
        %v1903 = vpop.f32.mrf.mxu0
        %v1904 = vpop.f32.mrf.mxu0
        %v1905 = vadd.f32 0.0, %v1904
        %v1906 = vpop.f32.mrf.mxu0
        %1907 = vdwg.mxu0
        %v1909 = vsel %vm1559, %v1849, 0
        %1911 = vmatprep.subr.bf16.mxu0 0
        %1912 = vmatpush1.bf16.msra.mxu0 0
        %1913 = vmatprep.subr.bf16.mxu0 0
        %1914 = vmatpush1.bf16.msra.mxu0 0
        %1915 = vmatprep.subr.bf16.mxu0 0
        %1916 = vmatpush1.bf16.msra.mxu0 0
        %1917 = vmatprep.subr.bf16.mxu0 0
        %1918 = vmatpush1.bf16.msra.mxu0 0
        %1919 = vmatprep.subr.bf16.mxu0 0
        %1920 = vmatpush1.bf16.msra.mxu0 0
        %1921 = vmatprep.subr.bf16.mxu0 0
        %1922 = vmatpush1.bf16.msra.mxu0 0
        %1923 = vmatprep.subr.bf16.mxu0 0
        %1924 = vmatpush1.bf16.msra.mxu0 0
        %1925 = vmatprep.subr.bf16.mxu0 0
        %1926 = vmatpush1.bf16.msra.mxu0 %v723
        %1927 = vmatprep.subr.bf16.mxu0 0
        %1928 = vmatpush2.bf16.msra.mxu0 0
        %1929 = vmatprep.subr.bf16.mxu0 0
        %1930 = vmatpush2.bf16.msra.mxu0 0
        %1931 = vmatprep.subr.bf16.mxu0 0
        %1932 = vmatpush2.bf16.msra.mxu0 0
        %1933 = vmatprep.subr.bf16.mxu0 0
        %1934 = vmatpush2.bf16.msra.mxu0 0
        %1935 = vmatprep.subr.bf16.mxu0 0
        %1936 = vmatpush2.bf16.msra.mxu0 0
        %1937 = vmatprep.subr.bf16.mxu0 0
        %1938 = vmatpush2.bf16.msra.mxu0 0
        %1939 = vmatprep.subr.bf16.mxu0 0
        %1940 = vmatpush2.bf16.msra.mxu0 0
        %1941 = vmatprep.subr.bf16.mxu0 0
        %1942 = vmatpush2.bf16.msra.mxu0 0
        %1943 = vmatprep.mubr.bf16.mxu0 0
        %1944 = vmatmul.mubr.bf16.gmra.mxu0 %v1909
        %v1945 = vpop.f32.mrf.mxu0
        %v1946 = vadd.f32 0.0, %v1945
        %v1947 = vpop.f32.mrf.mxu0
        %v1948 = vpop.f32.mrf.mxu0
        %v1949 = vadd.f32 0.0, %v1948
        %v1950 = vpop.f32.mrf.mxu0
        %1951 = vdwg.mxu0
        %v1953 = vsel %vm1559, %v1850, 0
        %1955 = vmatprep.subr.bf16.mxu0 0
        %1956 = vmatpush1.bf16.msra.mxu0 0
        %1957 = vmatprep.subr.bf16.mxu0 0
        %1958 = vmatpush1.bf16.msra.mxu0 0
        %1959 = vmatprep.subr.bf16.mxu0 0
        %1960 = vmatpush1.bf16.msra.mxu0 0
        %1961 = vmatprep.subr.bf16.mxu0 0
        %1962 = vmatpush1.bf16.msra.mxu0 0
        %1963 = vmatprep.subr.bf16.mxu0 0
        %1964 = vmatpush1.bf16.msra.mxu0 0
        %1965 = vmatprep.subr.bf16.mxu0 0
        %1966 = vmatpush1.bf16.msra.mxu0 0
        %1967 = vmatprep.subr.bf16.mxu0 0
        %1968 = vmatpush1.bf16.msra.mxu0 0
        %1969 = vmatprep.subr.bf16.mxu0 0
        %1970 = vmatpush1.bf16.msra.mxu0 %v724
        %1971 = vmatprep.subr.bf16.mxu0 0
        %1972 = vmatpush2.bf16.msra.mxu0 0
        %1973 = vmatprep.subr.bf16.mxu0 0
        %1974 = vmatpush2.bf16.msra.mxu0 0
        %1975 = vmatprep.subr.bf16.mxu0 0
        %1976 = vmatpush2.bf16.msra.mxu0 0
        %1977 = vmatprep.subr.bf16.mxu0 0
        %1978 = vmatpush2.bf16.msra.mxu0 0
        %1979 = vmatprep.subr.bf16.mxu0 0
        %1980 = vmatpush2.bf16.msra.mxu0 0
        %1981 = vmatprep.subr.bf16.mxu0 0
        %1982 = vmatpush2.bf16.msra.mxu0 0
        %1983 = vmatprep.subr.bf16.mxu0 0
        %1984 = vmatpush2.bf16.msra.mxu0 0
        %1985 = vmatprep.subr.bf16.mxu0 0
        %1986 = vmatpush2.bf16.msra.mxu0 0
        %1987 = vmatprep.mubr.bf16.mxu0 0
        %1988 = vmatmul.mubr.bf16.gmra.mxu0 %v1953
        %v1989 = vpop.f32.mrf.mxu0
        %v1990 = vadd.f32 0.0, %v1989
        %v1991 = vpop.f32.mrf.mxu0
        %v1992 = vpop.f32.mrf.mxu0
        %v1993 = vadd.f32 0.0, %v1992
        %v1994 = vpop.f32.mrf.mxu0
        %1995 = vdwg.mxu0
        %v1997 = vsel %vm1559, %v1851, 0
        %1999 = vmatprep.subr.bf16.mxu0 0
        %2000 = vmatpush1.bf16.msra.mxu0 0
        %2001 = vmatprep.subr.bf16.mxu0 0
        %2002 = vmatpush1.bf16.msra.mxu0 0
        %2003 = vmatprep.subr.bf16.mxu0 0
        %2004 = vmatpush1.bf16.msra.mxu0 0
        %2005 = vmatprep.subr.bf16.mxu0 0
        %2006 = vmatpush1.bf16.msra.mxu0 0
        %2007 = vmatprep.subr.bf16.mxu0 0
        %2008 = vmatpush1.bf16.msra.mxu0 0
        %2009 = vmatprep.subr.bf16.mxu0 0
        %2010 = vmatpush1.bf16.msra.mxu0 0
        %2011 = vmatprep.subr.bf16.mxu0 0
        %2012 = vmatpush1.bf16.msra.mxu0 0
        %2013 = vmatprep.subr.bf16.mxu0 0
        %2014 = vmatpush1.bf16.msra.mxu0 %v725
        %2015 = vmatprep.subr.bf16.mxu0 0
        %2016 = vmatpush2.bf16.msra.mxu0 0
        %2017 = vmatprep.subr.bf16.mxu0 0
        %2018 = vmatpush2.bf16.msra.mxu0 0
        %2019 = vmatprep.subr.bf16.mxu0 0
        %2020 = vmatpush2.bf16.msra.mxu0 0
        %2021 = vmatprep.subr.bf16.mxu0 0
        %2022 = vmatpush2.bf16.msra.mxu0 0
        %2023 = vmatprep.subr.bf16.mxu0 0
        %2024 = vmatpush2.bf16.msra.mxu0 0
        %2025 = vmatprep.subr.bf16.mxu0 0
        %2026 = vmatpush2.bf16.msra.mxu0 0
        %2027 = vmatprep.subr.bf16.mxu0 0
        %2028 = vmatpush2.bf16.msra.mxu0 0
        %2029 = vmatprep.subr.bf16.mxu0 0
        %2030 = vmatpush2.bf16.msra.mxu0 0
        %2031 = vmatprep.mubr.bf16.mxu0 0
        %2032 = vmatmul.mubr.bf16.gmra.mxu0 %v1997
        %v2033 = vpop.f32.mrf.mxu0
        %v2034 = vadd.f32 0.0, %v2033
        %v2035 = vpop.f32.mrf.mxu0
        %v2036 = vpop.f32.mrf.mxu0
        %v2037 = vadd.f32 0.0, %v2036
        %v2038 = vpop.f32.mrf.mxu0
        %2039 = vdwg.mxu0
        %v2041 = vsel %vm1559, %v1852, 0
        %2043 = vmatprep.subr.bf16.mxu0 0
        %2044 = vmatpush1.bf16.msra.mxu0 0
        %2045 = vmatprep.subr.bf16.mxu0 0
        %2046 = vmatpush1.bf16.msra.mxu0 0
        %2047 = vmatprep.subr.bf16.mxu0 0
        %2048 = vmatpush1.bf16.msra.mxu0 0
        %2049 = vmatprep.subr.bf16.mxu0 0
        %2050 = vmatpush1.bf16.msra.mxu0 0
        %2051 = vmatprep.subr.bf16.mxu0 0
        %2052 = vmatpush1.bf16.msra.mxu0 0
        %2053 = vmatprep.subr.bf16.mxu0 0
        %2054 = vmatpush1.bf16.msra.mxu0 0
        %2055 = vmatprep.subr.bf16.mxu0 0
        %2056 = vmatpush1.bf16.msra.mxu0 0
        %2057 = vmatprep.subr.bf16.mxu0 0
        %2058 = vmatpush1.bf16.msra.mxu0 %v731
        %2059 = vmatprep.subr.bf16.mxu0 0
        %2060 = vmatpush2.bf16.msra.mxu0 0
        %2061 = vmatprep.subr.bf16.mxu0 0
        %2062 = vmatpush2.bf16.msra.mxu0 0
        %2063 = vmatprep.subr.bf16.mxu0 0
        %2064 = vmatpush2.bf16.msra.mxu0 0
        %2065 = vmatprep.subr.bf16.mxu0 0
        %2066 = vmatpush2.bf16.msra.mxu0 0
        %2067 = vmatprep.subr.bf16.mxu0 0
        %2068 = vmatpush2.bf16.msra.mxu0 0
        %2069 = vmatprep.subr.bf16.mxu0 0
        %2070 = vmatpush2.bf16.msra.mxu0 0
        %2071 = vmatprep.subr.bf16.mxu0 0
        %2072 = vmatpush2.bf16.msra.mxu0 0
        %2073 = vmatprep.subr.bf16.mxu0 0
        %2074 = vmatpush2.bf16.msra.mxu0 0
        %2075 = vmatprep.mubr.bf16.mxu0 0
        %2076 = vmatmul.mubr.bf16.gmra.mxu0 %v2041
        %v2077 = vpop.f32.mrf.mxu0
        %v2078 = vadd.f32 0.0, %v2077
        %v2079 = vpop.f32.mrf.mxu0
        %v2080 = vpop.f32.mrf.mxu0
        %v2081 = vadd.f32 0.0, %v2080
        %v2082 = vpop.f32.mrf.mxu0
        %2083 = vdwg.mxu0
        %v2085 = vsel %vm1559, %v1853, 0
        %2087 = vmatprep.subr.bf16.mxu0 0
        %2088 = vmatpush1.bf16.msra.mxu0 0
        %2089 = vmatprep.subr.bf16.mxu0 0
        %2090 = vmatpush1.bf16.msra.mxu0 0
        %2091 = vmatprep.subr.bf16.mxu0 0
        %2092 = vmatpush1.bf16.msra.mxu0 0
        %2093 = vmatprep.subr.bf16.mxu0 0
        %2094 = vmatpush1.bf16.msra.mxu0 0
        %2095 = vmatprep.subr.bf16.mxu0 0
        %2096 = vmatpush1.bf16.msra.mxu0 0
        %2097 = vmatprep.subr.bf16.mxu0 0
        %2098 = vmatpush1.bf16.msra.mxu0 0
        %2099 = vmatprep.subr.bf16.mxu0 0
        %2100 = vmatpush1.bf16.msra.mxu0 0
        %2101 = vmatprep.subr.bf16.mxu0 0
        %2102 = vmatpush1.bf16.msra.mxu0 %v733
        %2103 = vmatprep.subr.bf16.mxu0 0
        %2104 = vmatpush2.bf16.msra.mxu0 0
        %2105 = vmatprep.subr.bf16.mxu0 0
        %2106 = vmatpush2.bf16.msra.mxu0 0
        %2107 = vmatprep.subr.bf16.mxu0 0
        %2108 = vmatpush2.bf16.msra.mxu0 0
        %2109 = vmatprep.subr.bf16.mxu0 0
        %2110 = vmatpush2.bf16.msra.mxu0 0
        %2111 = vmatprep.subr.bf16.mxu0 0
        %2112 = vmatpush2.bf16.msra.mxu0 0
        %2113 = vmatprep.subr.bf16.mxu0 0
        %2114 = vmatpush2.bf16.msra.mxu0 0
        %2115 = vmatprep.subr.bf16.mxu0 0
        %2116 = vmatpush2.bf16.msra.mxu0 0
        %2117 = vmatprep.subr.bf16.mxu0 0
        %2118 = vmatpush2.bf16.msra.mxu0 0
        %2119 = vmatprep.mubr.bf16.mxu0 0
        %2120 = vmatmul.mubr.bf16.gmra.mxu0 %v2085
        %v2121 = vpop.f32.mrf.mxu0
        %v2122 = vadd.f32 0.0, %v2121
        %v2123 = vpop.f32.mrf.mxu0
        %v2124 = vpop.f32.mrf.mxu0
        %v2125 = vadd.f32 0.0, %v2124
        %v2126 = vpop.f32.mrf.mxu0
        %2127 = vdwg.mxu0
        %v2129 = vsel %vm1559, %v1854, 0
        %2131 = vmatprep.subr.bf16.mxu0 0
        %2132 = vmatpush1.bf16.msra.mxu0 0
        %2133 = vmatprep.subr.bf16.mxu0 0
        %2134 = vmatpush1.bf16.msra.mxu0 0
        %2135 = vmatprep.subr.bf16.mxu0 0
        %2136 = vmatpush1.bf16.msra.mxu0 0
        %2137 = vmatprep.subr.bf16.mxu0 0
        %2138 = vmatpush1.bf16.msra.mxu0 0
        %2139 = vmatprep.subr.bf16.mxu0 0
        %2140 = vmatpush1.bf16.msra.mxu0 0
        %2141 = vmatprep.subr.bf16.mxu0 0
        %2142 = vmatpush1.bf16.msra.mxu0 0
        %2143 = vmatprep.subr.bf16.mxu0 0
        %2144 = vmatpush1.bf16.msra.mxu0 0
        %2145 = vmatprep.subr.bf16.mxu0 0
        %2146 = vmatpush1.bf16.msra.mxu0 %v735
        %2147 = vmatprep.subr.bf16.mxu0 0
        %2148 = vmatpush2.bf16.msra.mxu0 0
        %2149 = vmatprep.subr.bf16.mxu0 0
        %2150 = vmatpush2.bf16.msra.mxu0 0
        %2151 = vmatprep.subr.bf16.mxu0 0
        %2152 = vmatpush2.bf16.msra.mxu0 0
        %2153 = vmatprep.subr.bf16.mxu0 0
        %2154 = vmatpush2.bf16.msra.mxu0 0
        %2155 = vmatprep.subr.bf16.mxu0 0
        %2156 = vmatpush2.bf16.msra.mxu0 0
        %2157 = vmatprep.subr.bf16.mxu0 0
        %2158 = vmatpush2.bf16.msra.mxu0 0
        %2159 = vmatprep.subr.bf16.mxu0 0
        %2160 = vmatpush2.bf16.msra.mxu0 0
        %2161 = vmatprep.subr.bf16.mxu0 0
        %2162 = vmatpush2.bf16.msra.mxu0 0
        %2163 = vmatprep.mubr.bf16.mxu0 0
        %2164 = vmatmul.mubr.bf16.gmra.mxu0 %v2129
        %v2165 = vpop.f32.mrf.mxu0
        %v2166 = vadd.f32 0.0, %v2165
        %v2167 = vpop.f32.mrf.mxu0
        %v2168 = vpop.f32.mrf.mxu0
        %v2169 = vadd.f32 0.0, %v2168
        %v2170 = vpop.f32.mrf.mxu0
        %2171 = vdwg.mxu0
        %v2173 = vsel %vm1559, %v1855, 0
        %2175 = vmatprep.subr.bf16.mxu0 0
        %2176 = vmatpush1.bf16.msra.mxu0 0
        %2177 = vmatprep.subr.bf16.mxu0 0
        %2178 = vmatpush1.bf16.msra.mxu0 0
        %2179 = vmatprep.subr.bf16.mxu0 0
        %2180 = vmatpush1.bf16.msra.mxu0 0
        %2181 = vmatprep.subr.bf16.mxu0 0
        %2182 = vmatpush1.bf16.msra.mxu0 0
        %2183 = vmatprep.subr.bf16.mxu0 0
        %2184 = vmatpush1.bf16.msra.mxu0 0
        %2185 = vmatprep.subr.bf16.mxu0 0
        %2186 = vmatpush1.bf16.msra.mxu0 0
        %2187 = vmatprep.subr.bf16.mxu0 0
        %2188 = vmatpush1.bf16.msra.mxu0 0
        %2189 = vmatprep.subr.bf16.mxu0 0
        %2190 = vmatpush1.bf16.msra.mxu0 %v737
        %2191 = vmatprep.subr.bf16.mxu0 0
        %2192 = vmatpush2.bf16.msra.mxu0 0
        %2193 = vmatprep.subr.bf16.mxu0 0
        %2194 = vmatpush2.bf16.msra.mxu0 0
        %2195 = vmatprep.subr.bf16.mxu0 0
        %2196 = vmatpush2.bf16.msra.mxu0 0
        %2197 = vmatprep.subr.bf16.mxu0 0
        %2198 = vmatpush2.bf16.msra.mxu0 0
        %2199 = vmatprep.subr.bf16.mxu0 0
        %2200 = vmatpush2.bf16.msra.mxu0 0
        %2201 = vmatprep.subr.bf16.mxu0 0
        %2202 = vmatpush2.bf16.msra.mxu0 0
        %2203 = vmatprep.subr.bf16.mxu0 0
        %2204 = vmatpush2.bf16.msra.mxu0 0
        %2205 = vmatprep.subr.bf16.mxu0 0
        %2206 = vmatpush2.bf16.msra.mxu0 0
        %2207 = vmatprep.mubr.bf16.mxu0 0
        %2208 = vmatmul.mubr.bf16.gmra.mxu0 %v2173
        %v2209 = vpop.f32.mrf.mxu0
        %v2210 = vadd.f32 0.0, %v2209
        %v2211 = vpop.f32.mrf.mxu0
        %v2212 = vpop.f32.mrf.mxu0
        %v2213 = vadd.f32 0.0, %v2212
        %v2214 = vpop.f32.mrf.mxu0
        %2215 = vdwg.mxu0
        %v2217 = vsel %vm1559, %v1856, 0
        %2219 = vmatprep.subr.bf16.mxu0 0
        %2220 = vmatpush1.bf16.msra.mxu0 0
        %2221 = vmatprep.subr.bf16.mxu0 0
        %2222 = vmatpush1.bf16.msra.mxu0 0
        %2223 = vmatprep.subr.bf16.mxu0 0
        %2224 = vmatpush1.bf16.msra.mxu0 0
        %2225 = vmatprep.subr.bf16.mxu0 0
        %2226 = vmatpush1.bf16.msra.mxu0 0
        %2227 = vmatprep.subr.bf16.mxu0 0
        %2228 = vmatpush1.bf16.msra.mxu0 0
        %2229 = vmatprep.subr.bf16.mxu0 0
        %2230 = vmatpush1.bf16.msra.mxu0 0
        %2231 = vmatprep.subr.bf16.mxu0 0
        %2232 = vmatpush1.bf16.msra.mxu0 0
        %2233 = vmatprep.subr.bf16.mxu0 0
        %2234 = vmatpush1.bf16.msra.mxu0 %v743
        %2235 = vmatprep.subr.bf16.mxu0 0
        %2236 = vmatpush2.bf16.msra.mxu0 0
        %2237 = vmatprep.subr.bf16.mxu0 0
        %2238 = vmatpush2.bf16.msra.mxu0 0
        %2239 = vmatprep.subr.bf16.mxu0 0
        %2240 = vmatpush2.bf16.msra.mxu0 0
        %2241 = vmatprep.subr.bf16.mxu0 0
        %2242 = vmatpush2.bf16.msra.mxu0 0
        %2243 = vmatprep.subr.bf16.mxu0 0
        %2244 = vmatpush2.bf16.msra.mxu0 0
        %2245 = vmatprep.subr.bf16.mxu0 0
        %2246 = vmatpush2.bf16.msra.mxu0 0
        %2247 = vmatprep.subr.bf16.mxu0 0
        %2248 = vmatpush2.bf16.msra.mxu0 0
        %2249 = vmatprep.subr.bf16.mxu0 0
        %2250 = vmatpush2.bf16.msra.mxu0 0
        %2251 = vmatprep.mubr.bf16.mxu0 0
        %2252 = vmatmul.mubr.bf16.gmra.mxu0 %v2217
        %v2253 = vpop.f32.mrf.mxu0
        %v2254 = vadd.f32 0.0, %v2253
        %v2255 = vpop.f32.mrf.mxu0
        %v2256 = vpop.f32.mrf.mxu0
        %v2257 = vadd.f32 0.0, %v2256
        %v2258 = vpop.f32.mrf.mxu0
        %2259 = vdwg.mxu0
        %v2261 = vsel %vm1559, %v1857, 0
        %2263 = vmatprep.subr.bf16.mxu0 0
        %2264 = vmatpush1.bf16.msra.mxu0 0
        %2265 = vmatprep.subr.bf16.mxu0 0
        %2266 = vmatpush1.bf16.msra.mxu0 0
        %2267 = vmatprep.subr.bf16.mxu0 0
        %2268 = vmatpush1.bf16.msra.mxu0 0
        %2269 = vmatprep.subr.bf16.mxu0 0
        %2270 = vmatpush1.bf16.msra.mxu0 0
        %2271 = vmatprep.subr.bf16.mxu0 0
        %2272 = vmatpush1.bf16.msra.mxu0 0
        %2273 = vmatprep.subr.bf16.mxu0 0
        %2274 = vmatpush1.bf16.msra.mxu0 0
        %2275 = vmatprep.subr.bf16.mxu0 0
        %2276 = vmatpush1.bf16.msra.mxu0 0
        %2277 = vmatprep.subr.bf16.mxu0 0
        %2278 = vmatpush1.bf16.msra.mxu0 %v745
        %2279 = vmatprep.subr.bf16.mxu0 0
        %2280 = vmatpush2.bf16.msra.mxu0 0
        %2281 = vmatprep.subr.bf16.mxu0 0
        %2282 = vmatpush2.bf16.msra.mxu0 0
        %2283 = vmatprep.subr.bf16.mxu0 0
        %2284 = vmatpush2.bf16.msra.mxu0 0
        %2285 = vmatprep.subr.bf16.mxu0 0
        %2286 = vmatpush2.bf16.msra.mxu0 0
        %2287 = vmatprep.subr.bf16.mxu0 0
        %2288 = vmatpush2.bf16.msra.mxu0 0
        %2289 = vmatprep.subr.bf16.mxu0 0
        %2290 = vmatpush2.bf16.msra.mxu0 0
        %2291 = vmatprep.subr.bf16.mxu0 0
        %2292 = vmatpush2.bf16.msra.mxu0 0
        %2293 = vmatprep.subr.bf16.mxu0 0
        %2294 = vmatpush2.bf16.msra.mxu0 0
        %2295 = vmatprep.mubr.bf16.mxu0 0
        %2296 = vmatmul.mubr.bf16.gmra.mxu0 %v2261
        %v2297 = vpop.f32.mrf.mxu0
        %v2298 = vadd.f32 0.0, %v2297
        %v2299 = vpop.f32.mrf.mxu0
        %v2300 = vpop.f32.mrf.mxu0
        %v2301 = vadd.f32 0.0, %v2300
        %v2302 = vpop.f32.mrf.mxu0
        %2303 = vdwg.mxu0
        %v2305 = vsel %vm1559, %v1858, 0
        %2307 = vmatprep.subr.bf16.mxu0 0
        %2308 = vmatpush1.bf16.msra.mxu0 0
        %2309 = vmatprep.subr.bf16.mxu0 0
        %2310 = vmatpush1.bf16.msra.mxu0 0
        %2311 = vmatprep.subr.bf16.mxu0 0
        %2312 = vmatpush1.bf16.msra.mxu0 0
        %2313 = vmatprep.subr.bf16.mxu0 0
        %2314 = vmatpush1.bf16.msra.mxu0 0
        %2315 = vmatprep.subr.bf16.mxu0 0
        %2316 = vmatpush1.bf16.msra.mxu0 0
        %2317 = vmatprep.subr.bf16.mxu0 0
        %2318 = vmatpush1.bf16.msra.mxu0 0
        %2319 = vmatprep.subr.bf16.mxu0 0
        %2320 = vmatpush1.bf16.msra.mxu0 0
        %2321 = vmatprep.subr.bf16.mxu0 0
        %2322 = vmatpush1.bf16.msra.mxu0 %v747
        %2323 = vmatprep.subr.bf16.mxu0 0
        %2324 = vmatpush2.bf16.msra.mxu0 0
        %2325 = vmatprep.subr.bf16.mxu0 0
        %2326 = vmatpush2.bf16.msra.mxu0 0
        %2327 = vmatprep.subr.bf16.mxu0 0
        %2328 = vmatpush2.bf16.msra.mxu0 0
        %2329 = vmatprep.subr.bf16.mxu0 0
        %2330 = vmatpush2.bf16.msra.mxu0 0
        %2331 = vmatprep.subr.bf16.mxu0 0
        %2332 = vmatpush2.bf16.msra.mxu0 0
        %2333 = vmatprep.subr.bf16.mxu0 0
        %2334 = vmatpush2.bf16.msra.mxu0 0
        %2335 = vmatprep.subr.bf16.mxu0 0
        %2336 = vmatpush2.bf16.msra.mxu0 0
        %2337 = vmatprep.subr.bf16.mxu0 0
        %2338 = vmatpush2.bf16.msra.mxu0 0
        %2339 = vmatprep.mubr.bf16.mxu0 0
        %2340 = vmatmul.mubr.bf16.gmra.mxu0 %v2305
        %v2341 = vpop.f32.mrf.mxu0
        %v2342 = vadd.f32 0.0, %v2341
        %v2343 = vpop.f32.mrf.mxu0
        %v2344 = vpop.f32.mrf.mxu0
        %v2345 = vadd.f32 0.0, %v2344
        %v2346 = vpop.f32.mrf.mxu0
        %2347 = vdwg.mxu0
        %v2349 = vsel %vm1559, %v1859, 0
        %2351 = vmatprep.subr.bf16.mxu0 0
        %2352 = vmatpush1.bf16.msra.mxu0 0
        %2353 = vmatprep.subr.bf16.mxu0 0
        %2354 = vmatpush1.bf16.msra.mxu0 0
        %2355 = vmatprep.subr.bf16.mxu0 0
        %2356 = vmatpush1.bf16.msra.mxu0 0
        %2357 = vmatprep.subr.bf16.mxu0 0
        %2358 = vmatpush1.bf16.msra.mxu0 0
        %2359 = vmatprep.subr.bf16.mxu0 0
        %2360 = vmatpush1.bf16.msra.mxu0 0
        %2361 = vmatprep.subr.bf16.mxu0 0
        %2362 = vmatpush1.bf16.msra.mxu0 0
        %2363 = vmatprep.subr.bf16.mxu0 0
        %2364 = vmatpush1.bf16.msra.mxu0 0
        %2365 = vmatprep.subr.bf16.mxu0 0
        %2366 = vmatpush1.bf16.msra.mxu0 %v749
        %2367 = vmatprep.subr.bf16.mxu0 0
        %2368 = vmatpush2.bf16.msra.mxu0 0
        %2369 = vmatprep.subr.bf16.mxu0 0
        %2370 = vmatpush2.bf16.msra.mxu0 0
        %2371 = vmatprep.subr.bf16.mxu0 0
        %2372 = vmatpush2.bf16.msra.mxu0 0
        %2373 = vmatprep.subr.bf16.mxu0 0
        %2374 = vmatpush2.bf16.msra.mxu0 0
        %2375 = vmatprep.subr.bf16.mxu0 0
        %2376 = vmatpush2.bf16.msra.mxu0 0
        %2377 = vmatprep.subr.bf16.mxu0 0
        %2378 = vmatpush2.bf16.msra.mxu0 0
        %2379 = vmatprep.subr.bf16.mxu0 0
        %2380 = vmatpush2.bf16.msra.mxu0 0
        %2381 = vmatprep.subr.bf16.mxu0 0
        %2382 = vmatpush2.bf16.msra.mxu0 0
        %2383 = vmatprep.mubr.bf16.mxu0 0
        %2384 = vmatmul.mubr.bf16.gmra.mxu0 %v2349
        %v2385 = vpop.f32.mrf.mxu0
        %v2386 = vadd.f32 0.0, %v2385
        %v2387 = vpop.f32.mrf.mxu0
        %v2388 = vpop.f32.mrf.mxu0
        %v2389 = vadd.f32 0.0, %v2388
        %v2390 = vpop.f32.mrf.mxu0
        %2391 = vdwg.mxu0
        %v2393 = vsel %vm1559, %v1860, 0
        %2395 = vmatprep.subr.bf16.mxu0 0
        %2396 = vmatpush1.bf16.msra.mxu0 0
        %2397 = vmatprep.subr.bf16.mxu0 0
        %2398 = vmatpush1.bf16.msra.mxu0 0
        %2399 = vmatprep.subr.bf16.mxu0 0
        %2400 = vmatpush1.bf16.msra.mxu0 0
        %2401 = vmatprep.subr.bf16.mxu0 0
        %2402 = vmatpush1.bf16.msra.mxu0 0
        %2403 = vmatprep.subr.bf16.mxu0 0
        %2404 = vmatpush1.bf16.msra.mxu0 0
        %2405 = vmatprep.subr.bf16.mxu0 0
        %2406 = vmatpush1.bf16.msra.mxu0 0
        %2407 = vmatprep.subr.bf16.mxu0 0
        %2408 = vmatpush1.bf16.msra.mxu0 0
        %2409 = vmatprep.subr.bf16.mxu0 0
        %2410 = vmatpush1.bf16.msra.mxu0 %v755
        %2411 = vmatprep.subr.bf16.mxu0 0
        %2412 = vmatpush2.bf16.msra.mxu0 0
        %2413 = vmatprep.subr.bf16.mxu0 0
        %2414 = vmatpush2.bf16.msra.mxu0 0
        %2415 = vmatprep.subr.bf16.mxu0 0
        %2416 = vmatpush2.bf16.msra.mxu0 0
        %2417 = vmatprep.subr.bf16.mxu0 0
        %2418 = vmatpush2.bf16.msra.mxu0 0
        %2419 = vmatprep.subr.bf16.mxu0 0
        %2420 = vmatpush2.bf16.msra.mxu0 0
        %2421 = vmatprep.subr.bf16.mxu0 0
        %2422 = vmatpush2.bf16.msra.mxu0 0
        %2423 = vmatprep.subr.bf16.mxu0 0
        %2424 = vmatpush2.bf16.msra.mxu0 0
        %2425 = vmatprep.subr.bf16.mxu0 0
        %2426 = vmatpush2.bf16.msra.mxu0 0
        %2427 = vmatprep.mubr.bf16.mxu0 0
        %2428 = vmatmul.mubr.bf16.gmra.mxu0 %v2393
        %v2429 = vpop.f32.mrf.mxu0
        %v2430 = vadd.f32 0.0, %v2429
        %v2431 = vpop.f32.mrf.mxu0
        %v2432 = vpop.f32.mrf.mxu0
        %v2433 = vadd.f32 0.0, %v2432
        %v2434 = vpop.f32.mrf.mxu0
        %2435 = vdwg.mxu0
        %v2437 = vsel %vm1559, %v1861, 0
        %2439 = vmatprep.subr.bf16.mxu0 0
        %2440 = vmatpush1.bf16.msra.mxu0 0
        %2441 = vmatprep.subr.bf16.mxu0 0
        %2442 = vmatpush1.bf16.msra.mxu0 0
        %2443 = vmatprep.subr.bf16.mxu0 0
        %2444 = vmatpush1.bf16.msra.mxu0 0
        %2445 = vmatprep.subr.bf16.mxu0 0
        %2446 = vmatpush1.bf16.msra.mxu0 0
        %2447 = vmatprep.subr.bf16.mxu0 0
        %2448 = vmatpush1.bf16.msra.mxu0 0
        %2449 = vmatprep.subr.bf16.mxu0 0
        %2450 = vmatpush1.bf16.msra.mxu0 0
        %2451 = vmatprep.subr.bf16.mxu0 0
        %2452 = vmatpush1.bf16.msra.mxu0 0
        %2453 = vmatprep.subr.bf16.mxu0 0
        %2454 = vmatpush1.bf16.msra.mxu0 %v757
        %2455 = vmatprep.subr.bf16.mxu0 0
        %2456 = vmatpush2.bf16.msra.mxu0 0
        %2457 = vmatprep.subr.bf16.mxu0 0
        %2458 = vmatpush2.bf16.msra.mxu0 0
        %2459 = vmatprep.subr.bf16.mxu0 0
        %2460 = vmatpush2.bf16.msra.mxu0 0
        %2461 = vmatprep.subr.bf16.mxu0 0
        %2462 = vmatpush2.bf16.msra.mxu0 0
        %2463 = vmatprep.subr.bf16.mxu0 0
        %2464 = vmatpush2.bf16.msra.mxu0 0
        %2465 = vmatprep.subr.bf16.mxu0 0
        %2466 = vmatpush2.bf16.msra.mxu0 0
        %2467 = vmatprep.subr.bf16.mxu0 0
        %2468 = vmatpush2.bf16.msra.mxu0 0
        %2469 = vmatprep.subr.bf16.mxu0 0
        %2470 = vmatpush2.bf16.msra.mxu0 0
        %2471 = vmatprep.mubr.bf16.mxu0 0
        %2472 = vmatmul.mubr.bf16.gmra.mxu0 %v2437
        %v2473 = vpop.f32.mrf.mxu0
        %v2474 = vadd.f32 0.0, %v2473
        %v2475 = vpop.f32.mrf.mxu0
        %v2476 = vpop.f32.mrf.mxu0
        %v2477 = vadd.f32 0.0, %v2476
        %v2478 = vpop.f32.mrf.mxu0
        %2479 = vdwg.mxu0
        %v2481 = vsel %vm1559, %v1862, 0
        %2483 = vmatprep.subr.bf16.mxu0 0
        %2484 = vmatpush1.bf16.msra.mxu0 0
        %2485 = vmatprep.subr.bf16.mxu0 0
        %2486 = vmatpush1.bf16.msra.mxu0 0
        %2487 = vmatprep.subr.bf16.mxu0 0
        %2488 = vmatpush1.bf16.msra.mxu0 0
        %2489 = vmatprep.subr.bf16.mxu0 0
        %2490 = vmatpush1.bf16.msra.mxu0 0
        %2491 = vmatprep.subr.bf16.mxu0 0
        %2492 = vmatpush1.bf16.msra.mxu0 0
        %2493 = vmatprep.subr.bf16.mxu0 0
        %2494 = vmatpush1.bf16.msra.mxu0 0
        %2495 = vmatprep.subr.bf16.mxu0 0
        %2496 = vmatpush1.bf16.msra.mxu0 0
        %2497 = vmatprep.subr.bf16.mxu0 0
        %2498 = vmatpush1.bf16.msra.mxu0 %v759
        %2499 = vmatprep.subr.bf16.mxu0 0
        %2500 = vmatpush2.bf16.msra.mxu0 0
        %2501 = vmatprep.subr.bf16.mxu0 0
        %2502 = vmatpush2.bf16.msra.mxu0 0
        %2503 = vmatprep.subr.bf16.mxu0 0
        %2504 = vmatpush2.bf16.msra.mxu0 0
        %2505 = vmatprep.subr.bf16.mxu0 0
        %2506 = vmatpush2.bf16.msra.mxu0 0
        %2507 = vmatprep.subr.bf16.mxu0 0
        %2508 = vmatpush2.bf16.msra.mxu0 0
        %2509 = vmatprep.subr.bf16.mxu0 0
        %2510 = vmatpush2.bf16.msra.mxu0 0
        %2511 = vmatprep.subr.bf16.mxu0 0
        %2512 = vmatpush2.bf16.msra.mxu0 0
        %2513 = vmatprep.subr.bf16.mxu0 0
        %2514 = vmatpush2.bf16.msra.mxu0 0
        %2515 = vmatprep.mubr.bf16.mxu0 0
        %2516 = vmatmul.mubr.bf16.gmra.mxu0 %v2481
        %v2517 = vpop.f32.mrf.mxu0
        %v2518 = vadd.f32 0.0, %v2517
        %v2519 = vpop.f32.mrf.mxu0
        %v2520 = vpop.f32.mrf.mxu0
        %v2521 = vadd.f32 0.0, %v2520
        %v2522 = vpop.f32.mrf.mxu0
        %2523 = vdwg.mxu0
        %v2525 = vsel %vm1559, %v1863, 0
        %2527 = vmatprep.subr.bf16.mxu0 0
        %2528 = vmatpush1.bf16.msra.mxu0 0
        %2529 = vmatprep.subr.bf16.mxu0 0
        %2530 = vmatpush1.bf16.msra.mxu0 0
        %2531 = vmatprep.subr.bf16.mxu0 0
        %2532 = vmatpush1.bf16.msra.mxu0 0
        %2533 = vmatprep.subr.bf16.mxu0 0
        %2534 = vmatpush1.bf16.msra.mxu0 0
        %2535 = vmatprep.subr.bf16.mxu0 0
        %2536 = vmatpush1.bf16.msra.mxu0 0
        %2537 = vmatprep.subr.bf16.mxu0 0
        %2538 = vmatpush1.bf16.msra.mxu0 0
        %2539 = vmatprep.subr.bf16.mxu0 0
        %2540 = vmatpush1.bf16.msra.mxu0 0
        %2541 = vmatprep.subr.bf16.mxu0 0
        %2542 = vmatpush1.bf16.msra.mxu0 %v761
        %2543 = vmatprep.subr.bf16.mxu0 0
        %2544 = vmatpush2.bf16.msra.mxu0 0
        %2545 = vmatprep.subr.bf16.mxu0 0
        %2546 = vmatpush2.bf16.msra.mxu0 0
        %2547 = vmatprep.subr.bf16.mxu0 0
        %2548 = vmatpush2.bf16.msra.mxu0 0
        %2549 = vmatprep.subr.bf16.mxu0 0
        %2550 = vmatpush2.bf16.msra.mxu0 0
        %2551 = vmatprep.subr.bf16.mxu0 0
        %2552 = vmatpush2.bf16.msra.mxu0 0
        %2553 = vmatprep.subr.bf16.mxu0 0
        %2554 = vmatpush2.bf16.msra.mxu0 0
        %2555 = vmatprep.subr.bf16.mxu0 0
        %2556 = vmatpush2.bf16.msra.mxu0 0
        %2557 = vmatprep.subr.bf16.mxu0 0
        %2558 = vmatpush2.bf16.msra.mxu0 0
        %2559 = vmatprep.mubr.bf16.mxu0 0
        %2560 = vmatmul.mubr.bf16.gmra.mxu0 %v2525
        %v2561 = vpop.f32.mrf.mxu0
        %v2562 = vadd.f32 0.0, %v2561
        %v2563 = vpop.f32.mrf.mxu0
        %v2564 = vpop.f32.mrf.mxu0
        %v2565 = vadd.f32 0.0, %v2564
        %v2566 = vpop.f32.mrf.mxu0
        %2567 = vdwg.mxu0
        %v2568 = vrcp.pop %v1754
        %v2569 = vrcp.pop %v1757
        %v2570 = vrcp.pop %v1760
        %v2571 = vrcp.pop %v1763
        %v2572 = vrcp.pop %v1766
        %v2573 = vrcp.pop %v1769
        %v2574 = vrcp.pop %v1772
        %v2575 = vrcp.pop %v1775
        %v2576 = vrcp.pop %v1778
        %v2577 = vrcp.pop %v1781
        %v2578 = vrcp.pop %v1784
        %v2579 = vrcp.pop %v1787
        %v2580 = vrcp.pop %v1790
        %v2581 = vrcp.pop %v1793
        %v2582 = vrcp.pop %v1796
        %v2583 = vrcp.pop %v1799
        %v2584 = vrcp.pop %v1802
        %v2585 = vrcp.pop %v1805
        %v2586 = vrcp.pop %v1808
        %v2587 = vrcp.pop %v1811
        %v2588 = vrcp.pop %v1814
        %v2589 = vrcp.pop %v1817
        %v2590 = vrcp.pop %v1820
        %v2591 = vrcp.pop %v1823
        %v2592 = vrcp.pop %v1826
        %v2593 = vrcp.pop %v1829
        %v2594 = vrcp.pop %v1832
        %v2595 = vrcp.pop %v1835
        %v2596 = vrcp.pop %v1838
        %v2597 = vrcp.pop %v1841
        %v2598 = vrcp.pop %v1844
        %v2599 = vrcp.pop %v1847
        %v2600 = vmul.f32 %v1902, %v2568
        %v2601 = vmul.f32 %v1905, %v2569
        %v2602 = vmul.f32 %v1946, %v2570
        %v2603 = vmul.f32 %v1949, %v2571
        %v2604 = vmul.f32 %v1990, %v2572
        %v2605 = vmul.f32 %v1993, %v2573
        %v2606 = vmul.f32 %v2034, %v2574
        %v2607 = vmul.f32 %v2037, %v2575
        %v2608 = vmul.f32 %v2078, %v2576
        %v2609 = vmul.f32 %v2081, %v2577
        %v2610 = vmul.f32 %v2122, %v2578
        %v2611 = vmul.f32 %v2125, %v2579
        %v2612 = vmul.f32 %v2166, %v2580
        %v2613 = vmul.f32 %v2169, %v2581
        %v2614 = vmul.f32 %v2210, %v2582
        %v2615 = vmul.f32 %v2213, %v2583
        %v2616 = vmul.f32 %v2254, %v2584
        %v2617 = vmul.f32 %v2257, %v2585
        %v2618 = vmul.f32 %v2298, %v2586
        %v2619 = vmul.f32 %v2301, %v2587
        %v2620 = vmul.f32 %v2342, %v2588
        %v2621 = vmul.f32 %v2345, %v2589
        %v2622 = vmul.f32 %v2386, %v2590
        %v2623 = vmul.f32 %v2389, %v2591
        %v2624 = vmul.f32 %v2430, %v2592
        %v2625 = vmul.f32 %v2433, %v2593
        %v2626 = vmul.f32 %v2474, %v2594
        %v2627 = vmul.f32 %v2477, %v2595
        %v2628 = vmul.f32 %v2518, %v2596
        %v2629 = vmul.f32 %v2521, %v2597
        %v2630 = vmul.f32 %v2562, %v2598
        %v2631 = vmul.f32 %v2565, %v2599
        %v2632 = vpack.c.bf16 %v2601, %v2600
        %v2633 = vpack.c.bf16 %v2603, %v2602
        %v2634 = vpack.c.bf16 %v2605, %v2604
        %v2635 = vpack.c.bf16 %v2607, %v2606
        %v2636 = vpack.c.bf16 %v2609, %v2608
        %v2637 = vpack.c.bf16 %v2611, %v2610
        %v2638 = vpack.c.bf16 %v2613, %v2612
        %v2639 = vpack.c.bf16 %v2615, %v2614
        %v2640 = vpack.c.bf16 %v2617, %v2616
        %v2641 = vpack.c.bf16 %v2619, %v2618
        %v2642 = vpack.c.bf16 %v2621, %v2620
        %v2643 = vpack.c.bf16 %v2623, %v2622
        %v2644 = vpack.c.bf16 %v2625, %v2624
        %v2645 = vpack.c.bf16 %v2627, %v2626
        %v2646 = vpack.c.bf16 %v2629, %v2628
        %v2647 = vpack.c.bf16 %v2631, %v2630
        %2652 = vrot.lane.b32.xlu0 %v2636, 8
        %v2653 = vpop.permute.xlu0 %2652
        %2654 = vrot.lane.b32.xlu0 %v2637, 8
        %v2655 = vpop.permute.xlu0 %2654
        %2656 = vrot.lane.b32.xlu0 %v2638, 8
        %v2657 = vpop.permute.xlu0 %2656
        %2658 = vrot.lane.b32.xlu0 %v2639, 8
        %v2659 = vpop.permute.xlu0 %2658
        %2664 = vrot.lane.b32.xlu0 %v2640, 16
        %v2665 = vpop.permute.xlu0 %2664
        %2666 = vrot.lane.b32.xlu0 %v2641, 16
        %v2667 = vpop.permute.xlu0 %2666
        %2668 = vrot.lane.b32.xlu0 %v2642, 16
        %v2669 = vpop.permute.xlu0 %2668
        %2670 = vrot.lane.b32.xlu0 %v2643, 16
        %v2671 = vpop.permute.xlu0 %2670
        %2676 = vrot.lane.b32.xlu0 %v2644, 24
        %v2677 = vpop.permute.xlu0 %2676
        %2678 = vrot.lane.b32.xlu0 %v2645, 24
        %v2679 = vpop.permute.xlu0 %2678
        %2680 = vrot.lane.b32.xlu0 %v2646, 24
        %v2681 = vpop.permute.xlu0 %2680
        %2682 = vrot.lane.b32.xlu0 %v2647, 24
        %v2683 = vpop.permute.xlu0 %2682
        %v2686 = vsel %vm766, %v2632, %v2653
        %v2689 = vsel %vm766, %v2633, %v2655
        %v2692 = vsel %vm766, %v2634, %v2657
        %v2695 = vsel %vm766, %v2635, %v2659
        %v2697 = vsel %vm1559, %v2686, %v2665
        %v2699 = vsel %vm1559, %v2689, %v2667
        %v2701 = vsel %vm1559, %v2692, %v2669
        %v2703 = vsel %vm1559, %v2695, %v2671
        %vm2704 = vcmask 195584
        %v2706 = vsel %vm2704, %v2697, %v2677
        %v2708 = vsel %vm2704, %v2699, %v2679
        %v2710 = vsel %vm2704, %v2701, %v2681
        %v2712 = vsel %vm2704, %v2703, %v2683
        %v2713 = vld [vmem:[#allocation10] sm:$0xf]
        %v2714 = vld [vmem:[#allocation10 + $0x4] sm:$0xf]
        %v2715 = vld [vmem:[#allocation10 + $0x8] sm:$0xf]
        %v2716 = vld [vmem:[#allocation10 + $0xc] sm:$0xf]
        %v2717 = vld [vmem:[%s5] sm:$0x1]
        %v2719 = vlaneseq
        %v2720 = vshrl.u32 %v2719, 7
        %v2721 = vsub.s32 0, %v2720
        %v2722 = vrot.slane %v2717, %v2721
        %v2728 = vunpack.c.l.b16 %v2713
        %v2729 = vunpack.c.l.b16 %v2714
        %v2730 = vunpack.c.l.b16 %v2715
        %v2731 = vunpack.c.l.b16 %v2716
        %v2732 = vpack.c.b16 %v2729, %v2728
        %v2733 = vpack.c.b16 %v2731, %v2730
        %v2736 = vsel %vm418, %v2706, 0
        %v2738 = vsel %vm418, %v2708, 0
        %v2740 = vsel %vm418, %v2710, 0
        %v2742 = vsel %vm418, %v2712, 0
        %2744 = vmatprep.subr.bf16.mxu0 0
        %2745 = vmatpush1.bf16.msra.mxu0 0
        %2746 = vmatprep.subr.bf16.mxu0 0
        %2747 = vmatpush1.bf16.msra.mxu0 0
        %2748 = vmatprep.subr.bf16.mxu0 0
        %2749 = vmatpush1.bf16.msra.mxu0 0
        %2750 = vmatprep.subr.bf16.mxu0 0
        %2751 = vmatpush1.bf16.msra.mxu0 0
        %2752 = vmatprep.subr.bf16.mxu0 0
        %2753 = vmatpush1.bf16.msra.mxu0 0
        %2754 = vmatprep.subr.bf16.mxu0 0
        %2755 = vmatpush1.bf16.msra.mxu0 0
        %2756 = vmatprep.subr.bf16.mxu0 0
        %2757 = vmatpush1.bf16.msra.mxu0 %v2733
        %2758 = vmatprep.subr.bf16.mxu0 0
        %2759 = vmatpush1.bf16.msra.mxu0 %v2732
        %2760 = vmatprep.subr.bf16.mxu0 0
        %2761 = vmatpush2.bf16.msra.mxu0 0
        %2762 = vmatprep.subr.bf16.mxu0 0
        %2763 = vmatpush2.bf16.msra.mxu0 0
        %2764 = vmatprep.subr.bf16.mxu0 0
        %2765 = vmatpush2.bf16.msra.mxu0 0
        %2766 = vmatprep.subr.bf16.mxu0 0
        %2767 = vmatpush2.bf16.msra.mxu0 0
        %2768 = vmatprep.subr.bf16.mxu0 0
        %2769 = vmatpush2.bf16.msra.mxu0 0
        %2770 = vmatprep.subr.bf16.mxu0 0
        %2771 = vmatpush2.bf16.msra.mxu0 0
        %2772 = vmatprep.subr.bf16.mxu0 0
        %2773 = vmatpush2.bf16.msra.mxu0 0
        %2774 = vmatprep.subr.bf16.mxu0 0
        %2775 = vmatpush2.bf16.msra.mxu0 0
        %2776 = vmatprep.mubr.bf16.mxu0 0
        %2777 = vmatmul.mubr.bf16.gmra.mxu0 %v2736
        %v2778 = vpop.f32.mrf.mxu0
        %v2779 = vadd.f32 %v2722, %v2778
        %v2780 = vpop.f32.mrf.mxu0
        %v2781 = vpop.f32.mrf.mxu0
        %v2782 = vadd.f32 %v2722, %v2781
        %v2783 = vpop.f32.mrf.mxu0
        %2784 = vmatprep.mubr.bf16.mxu0 0
        %2785 = vmatmul.mubr.bf16.gmra.mxu0 %v2738
        %v2786 = vpop.f32.mrf.mxu0
        %v2787 = vadd.f32 %v2722, %v2786
        %v2788 = vpop.f32.mrf.mxu0
        %v2789 = vpop.f32.mrf.mxu0
        %v2790 = vadd.f32 %v2722, %v2789
        %v2791 = vpop.f32.mrf.mxu0
        %2792 = vmatprep.mubr.bf16.mxu0 0
        %2793 = vmatmul.mubr.bf16.gmra.mxu0 %v2740
        %v2794 = vpop.f32.mrf.mxu0
        %v2795 = vadd.f32 %v2722, %v2794
        %v2796 = vpop.f32.mrf.mxu0
        %v2797 = vpop.f32.mrf.mxu0
        %v2798 = vadd.f32 %v2722, %v2797
        %v2799 = vpop.f32.mrf.mxu0
        %2800 = vmatprep.mubr.bf16.mxu0 0
        %2801 = vmatmul.mubr.bf16.gmra.mxu0 %v2742
        %v2802 = vpop.f32.mrf.mxu0
        %v2803 = vadd.f32 %v2722, %v2802
        %v2804 = vpop.f32.mrf.mxu0
        %v2805 = vpop.f32.mrf.mxu0
        %v2806 = vadd.f32 %v2722, %v2805
        %v2807 = vpop.f32.mrf.mxu0
        %2808 = vdwg.mxu0
        %v2809 = vpack.c.bf16 %v2782, %v2779
        %v2810 = vpack.c.bf16 %v2790, %v2787
        %v2811 = vpack.c.bf16 %v2798, %v2795
        %v2812 = vpack.c.bf16 %v2806, %v2803
        %v2817 = vunpack.c.l.b16 %v2809
        %v2818 = vunpack.c.h.b16 %v2809
        %v2819 = vunpack.c.l.b16 %v2810
        %v2820 = vunpack.c.h.b16 %v2810
        %v2821 = vunpack.c.l.b16 %v2811
        %v2822 = vunpack.c.h.b16 %v2811
        %v2823 = vunpack.c.l.b16 %v2812
        %v2824 = vunpack.c.h.b16 %v2812
        %v2825 = vpack.c.b16 %v2817, %v2817
        %v2826 = vpack.c.b16 %v2818, %v2818
        %v2827 = vpack.c.b16 %v2819, %v2819
        %v2828 = vpack.c.b16 %v2820, %v2820
        %v2829 = vpack.c.b16 %v2821, %v2821
        %v2830 = vpack.c.b16 %v2822, %v2822
        %v2831 = vpack.c.b16 %v2823, %v2823
        %v2832 = vpack.c.b16 %v2824, %v2824
        %vm2841 = vcmask 257024
        %2842 = vst.msk [vmem:[%s370] sm:$0xf] %vm2841, %v2825
        %2843 = vst.msk [vmem:[%s370 + $0x4] sm:$0xf] %vm2841, %v2826
        %2844 = vst.msk [vmem:[%s370 + $0x8] sm:$0xf] %vm2841, %v2827
        %2845 = vst.msk [vmem:[%s370 + $0xc] sm:$0xf] %vm2841, %v2828
        %2846 = vst.msk [vmem:[%s370 + $0x10] sm:$0xf] %vm2841, %v2829
        %2847 = vst.msk [vmem:[%s370 + $0x14] sm:$0xf] %vm2841, %v2830
        %2848 = vst.msk [vmem:[%s370 + $0x18] sm:$0xf] %vm2841, %v2831
        %2849 = vst.msk [vmem:[%s370 + $0x1c] sm:$0xf] %vm2841, %v2832
        %s2850 = sand.u32 %s187, 1
        %s2851 = scalar_lea.sflag [#allocation4], %s2850
        %s2852 = sand.u32 %s187, 1
        %s2853 = smul.addr %s2852, 32
        %s2854 = scalar_lea.vmem [#allocation13], %s2853
        // Predicated region
        $region73: #{tpu_custom_call.1} parent=47 // pred_check
          %p2855 = pneg %p197
        $region74: #{tpu_custom_call.1} parent=47 // pred_check_branch
          %2857 = sbr.rel (%p2855) target = $region76
        $region75: #{tpu_custom_call.1} parent=47 // pred_region
          %s2858 = smul.u32 4, %s27
          %s2860 = ssub.s32 512, 512
          %2861 = vsyncadd %s2851, %s2860
          %s2862 = smul.addr %s2858, 2
          %s2863 = smul.addr %s2862, 64
          %s2864 = scalar_lea.hbm %s7, %s2863
          %s2865 = sshll.u32 %s2854, 4
          %s2866 = int_to_ptr.vmem [resolvable:$true] %s2865
          %2871 = dma.vmem_to_hbm [thread:$0]  %s2866, 512, %s2864, %s2851, 64, 64, 4
        $region76: #{tpu_custom_call.1} parent=47 // pred_fallthru
          _
      $region48: #{tpu_custom_call.1} parent=5 // pred_fallthru
        _
      %p2872 = scmp.le.s32.totalorder 2, %s22
      // Predicated region
      $region77: #{tpu_custom_call.1} parent=5 // pred_check
        %p2873 = pneg %p2872
      $region78: #{tpu_custom_call.1} parent=5 // pred_check_branch
        %2875 = sbr.rel (%p2873) target = $region80
      $region79: #{tpu_custom_call.1} parent=5 // pred_region
        %s2876 = ssub.s32 %s22, 2
        // Predicated region
        $region81: #{tpu_custom_call.1} parent=79 // pred_check
          %p2877 = pneg %p203
        $region82: #{tpu_custom_call.1} parent=79 // pred_check_branch
          %2879 = sbr.rel (%p2877) target = $region84
        $region83: #{tpu_custom_call.1} parent=79 // pred_region
          %s2880 = sand.u32 %s188, 1
          %s2881 = scalar_lea.sflag [#allocation4], %s2880
          %s2882 = sand.u32 %s188, 1
          %s2883 = smul.addr %s2882, 32
          %s2884 = scalar_lea.vmem [#allocation13], %s2883
          %2885 = dma.done %s2881, 512
        $region84: #{tpu_custom_call.1} parent=79 // pred_fallthru
          _
      $region80: #{tpu_custom_call.1} parent=5 // pred_fallthru
        _
    $region6: #{tpu_custom_call.1} parent=1 // loop_footer
      %s26 = sadd.s32 1, %s22
    $region7: #{tpu_custom_call.1} parent=1 // loop_footer_branch
      %21 = sbr.rel target = $region3
    $region8: #{tpu_custom_call.1} parent=1 // loop_exit
      _
    %2886 = vsyncpa [#allocation3], 1
    %s2887 = scalar_lea.sflag [#allocation3], 1
    %2888 = vsyncpa %s2887, 1
    %2889 = vsyncpa [#allocation6], 1
    %2890 = vsyncpa [#allocation9], 1
    %2891 = vsyncpa [#allocation12], 1
    %2892 = vsyncpa [#allocation4], 1
    %s2893 = scalar_lea.sflag [#allocation4], 1
    %2894 = vsyncpa %s2893, 1

</llo_original>
